<compile_context>
chip_gen: v5e
topology: v5e:2x2
jax: 0.10.0
libtpu: 0.0.40
codegen_flags: <defaults>
</compile_context>

<pallas_src>
import functools

import jax
import jax.numpy as jnp
import numpy as np
from jax.experimental import pallas as pl
from jax.experimental.pallas import tpu as pltpu


def _round_up(x, m):
    return ((x + m - 1) // m) * m


# ----------------------------------------------------------------------------
# Pallas kernels
# ----------------------------------------------------------------------------
def _gru_stack_kernel(x_ref, wih_ref, whh_ref, bgx_ref, bhn_ref, out_ref,
                      buf_a, buf_b, gx_scr, h_scr, *, n_layers, t_chunk):
    """All GRU layers fused, PyTorch gate ordering [r, z, n], time-major.

    x_ref:   (Sp, TB, D)   time-major input sequence (one batch tile)
    wih_ref: (L, D, 3D)    W_ih^T per layer (pre-transposed)
    whh_ref: (L, D, 3D)    W_hh^T per layer (pre-transposed)
    bgx_ref: (L, 1, 3D)    b_ih + [b_hh_r, b_hh_z, 0]   (folded bias)
    bhn_ref: (L, 1, D)     b_hh n-gate bias (must stay inside r * (...))
    out_ref: (Sp, TB, D)   hidden states of the last layer, every timestep
    buf_a/buf_b: VMEM (Sp, TB, D)  ping-pong activation buffers across layers
    gx_scr:  VMEM (t_chunk, TB, 3D) per-time-chunk input-to-hidden gates
    h_scr:   VMEM (TB, D)  recurrent state
    """
    Sp, TB, D = out_ref.shape
    n_chunks = Sp // t_chunk
    bufs = (buf_a, buf_b)

    src = x_ref
    for layer in range(n_layers):
        dst = out_ref if layer == n_layers - 1 else bufs[layer % 2]
        h_scr[...] = jnp.zeros_like(h_scr)

        def chunk_body(c, carry, src=src, dst=dst, layer=layer):
            t0 = pl.multiple_of(c * t_chunk, t_chunk)
            x_chunk = src[pl.ds(t0, t_chunk)]                        # (TC,TB,D)
            gx = jnp.dot(x_chunk.reshape(t_chunk * TB, D), wih_ref[layer],
                         preferred_element_type=jnp.float32)
            gx = gx + bgx_ref[layer]                                 # (+ (1,3D))
            gx_scr[...] = gx.reshape(t_chunk, TB, 3 * D)

            def step(t, carry2):
                h_prev = h_scr[...]                                  # (TB, D)
                g_x = gx_scr[t]                                      # (TB, 3D)
                g_h = jnp.dot(h_prev, whh_ref[layer],
                              preferred_element_type=jnp.float32)    # (TB, 3D)
                r = jax.nn.sigmoid(g_x[:, 0:D] + g_h[:, 0:D])
                z = jax.nn.sigmoid(g_x[:, D:2 * D] + g_h[:, D:2 * D])
                n = jnp.tanh(g_x[:, 2 * D:] +
                             r * (g_h[:, 2 * D:] + bhn_ref[layer]))
                h_new = (1.0 - z) * n + z * h_prev
                h_scr[...] = h_new
                dst[t0 + t] = h_new
                return carry2

            jax.lax.fori_loop(0, t_chunk, step, 0)
            return carry

        jax.lax.fori_loop(0, n_chunks, chunk_body, 0)
        src = dst


def _ln_fc_kernel(h_ref, g_ref, b_ref, w_ref, bf_ref, out_ref, *, eps):
    """LayerNorm over last dim + tied-weight projection, one (rows, vocab) tile.

    h_ref:  (TN, D)    rows of GRU output
    g_ref:  (1, D)     LayerNorm gamma
    b_ref:  (1, D)     LayerNorm beta
    w_ref:  (D, TV)    column tile of item_embed.weight^T (padded to 128)
    bf_ref: (1, TV)    column tile of fc bias (padded)
    out_ref:(TN, TV)
    """
    h = h_ref[...]
    mu = jnp.mean(h, axis=-1, keepdims=True)
    var = jnp.mean((h - mu) ** 2, axis=-1, keepdims=True)
    hn = (h - mu) * jax.lax.rsqrt(var + eps)
    hn = hn * g_ref[0, :] + b_ref[0, :]
    out_ref[...] = jnp.dot(hn, w_ref[...],
                           preferred_element_type=jnp.float32) + bf_ref[0, :]


# ----------------------------------------------------------------------------
# pallas_call wrappers
# ----------------------------------------------------------------------------
def gru_stack(x_sbd, wih_t, whh_t, b_gx, b_hn, *, batch_tile, t_chunk):
    Sp, Bp, D = x_sbd.shape
    L = wih_t.shape[0]
    n_btiles = Bp // batch_tile

    f32 = 4
    blk = Sp * batch_tile * D * f32
    w_bytes = (2 * L * D * 3 * D + L * 4 * D) * f32
    scr_bytes = 2 * blk + t_chunk * batch_tile * 3 * D * f32 + batch_tile * D * f32
    est = 4 * blk + 2 * w_bytes + scr_bytes          # dbl-buffered in/out + w + scratch
    vmem_limit = int(min(64 << 20, max(est + (4 << 20), 32 << 20)))

    flops = int(4 * L * Sp * Bp * 3 * D * D)          # ih + hh matmuls
    trans = int(L * Sp * Bp * 3 * D)                  # 2 sigmoid + 1 tanh per gate trio
    bytes_acc = int((2 * Sp * Bp * D + 2 * L * D * 3 * D + L * 4 * D) * f32)

    kernel = functools.partial(_gru_stack_kernel, n_layers=L, t_chunk=t_chunk)
    return pl.pallas_call(
        kernel,
        out_shape=jax.ShapeDtypeStruct((Sp, Bp, D), jnp.float32),
        grid=(n_btiles,),
        in_specs=[
            pl.BlockSpec((Sp, batch_tile, D), lambda b: (0, b, 0)),
            pl.BlockSpec((L, D, 3 * D), lambda b: (0, 0, 0)),
            pl.BlockSpec((L, D, 3 * D), lambda b: (0, 0, 0)),
            pl.BlockSpec((L, 1, 3 * D), lambda b: (0, 0, 0)),
            pl.BlockSpec((L, 1, D), lambda b: (0, 0, 0)),
        ],
        out_specs=pl.BlockSpec((Sp, batch_tile, D), lambda b: (0, b, 0)),
        scratch_shapes=[
            pltpu.VMEM((Sp, batch_tile, D), jnp.float32),
            pltpu.VMEM((Sp, batch_tile, D), jnp.float32),
            pltpu.VMEM((t_chunk, batch_tile, 3 * D), jnp.float32),
            pltpu.VMEM((batch_tile, D), jnp.float32),
        ],
        compiler_params=pltpu.CompilerParams(
            dimension_semantics=("parallel",),
            vmem_limit_bytes=vmem_limit),
        cost_estimate=pl.CostEstimate(flops=flops, transcendentals=trans,
                                      bytes_accessed=bytes_acc),
    )(x_sbd, wih_t, whh_t, b_gx, b_hn)


def ln_fc(h_2d, gamma, beta, w_t, b_fc, *, row_tile, col_tile):
    Np, D = h_2d.shape
    Vp = w_t.shape[1]

    est = (2 * (row_tile * D + D * col_tile + col_tile + row_tile * col_tile)
           + 4 * D) * 4
    vmem_limit = int(min(64 << 20, max(2 * est + (2 << 20), 16 << 20)))

    return pl.pallas_call(
        functools.partial(_ln_fc_kernel, eps=1e-5),
        out_shape=jax.ShapeDtypeStruct((Np, Vp), jnp.float32),
        grid=(Np // row_tile, Vp // col_tile),
        in_specs=[
            pl.BlockSpec((row_tile, D), lambda i, j: (i, 0)),
            pl.BlockSpec((1, D), lambda i, j: (0, 0)),
            pl.BlockSpec((1, D), lambda i, j: (0, 0)),
            pl.BlockSpec((D, col_tile), lambda i, j: (0, j)),
            pl.BlockSpec((1, col_tile), lambda i, j: (0, j)),
        ],
        out_specs=pl.BlockSpec((row_tile, col_tile), lambda i, j: (i, j)),
        compiler_params=pltpu.CompilerParams(
            dimension_semantics=("parallel", "parallel"),
            vmem_limit_bytes=vmem_limit),
        cost_estimate=pl.CostEstimate(
            flops=int(2 * Np * D * Vp + 8 * Np * D),
            transcendentals=int(Np),
            bytes_accessed=int((Np * D + D * Vp + Np * Vp + Vp + 2 * D) * 4)),
    )(h_2d, gamma, beta, w_t, b_fc)


# ----------------------------------------------------------------------------
# One-time parameter preparation (hoisted transposes, folded biases, padded V)
# ----------------------------------------------------------------------------
def prepare_params(params):
    D = params["gamma"].shape[0]
    L = params["n_layers"]
    V = params["W_e"].shape[0]
    Vp = _round_up(V, 128)                            # lane-dense vocab dim

    wih_t = jnp.stack([jnp.transpose(params["w_ih"][l]) for l in range(L)])
    whh_t = jnp.stack([jnp.transpose(params["w_hh"][l]) for l in range(L)])

    b_gx, b_hn = [], []
    for l in range(L):
        bih, bhh = params["b_ih"][l], params["b_hh"][l]
        # Fold the r/z halves of b_hh into the precomputed gx bias.
        b_gx.append(bih + jnp.concatenate(
            [bhh[:2 * D], jnp.zeros((D,), jnp.float32)]))
        b_hn.append(bhh[2 * D:])
    b_gx = jnp.stack(b_gx)[:, None, :]                # (L, 1, 3D)
    b_hn = jnp.stack(b_hn)[:, None, :]                # (L, 1, D)

    W_e_t_pad = jnp.zeros((D, Vp), jnp.float32).at[:, :V].set(
        jnp.transpose(params["W_e"]))
    b_fc_pad = jnp.zeros((1, Vp), jnp.float32).at[0, :V].set(params["b_fc"])

    return dict(
        W_e=params["W_e"], W_e_t_pad=W_e_t_pad, b_fc_pad=b_fc_pad,
        wih_t=wih_t, whh_t=whh_t, b_gx=b_gx, b_hn=b_hn,
        gamma=params["gamma"][None, :], beta=params["beta"][None, :],
        n_layers=L, vocab=V,
    )


# ----------------------------------------------------------------------------
# Forward pass
# ----------------------------------------------------------------------------
def forward_pallas(idx, prep, *, t_chunk_max=32, row_tile_max=256,
                   col_tile_max=512):
    """idx: (B, S) int32 item ids -> logits (B, S, n_items+1)."""
    W_e = prep["W_e"]
    V = prep["vocab"]
    emb = jnp.take(W_e, idx, axis=0)                  # (B, S, D) gather (glue)
    B, S, D = emb.shape

    # --- GRU stack (time-major, batch-tiled) ---
    batch_tile = min(128, _round_up(B, 8))
    Bp = _round_up(B, batch_tile)
    n_chunks = pl.cdiv(S, t_chunk_max)
    t_chunk = pl.cdiv(S, n_chunks)
    Sp = n_chunks * t_chunk

    x = jnp.transpose(emb, (1, 0, 2))                 # (S, B, D) time-major
    x = jnp.pad(x, ((0, Sp - S), (0, Bp - B), (0, 0)))
    h = gru_stack(x, prep["wih_t"], prep["whh_t"], prep["b_gx"], prep["b_hn"],
                  batch_tile=batch_tile, t_chunk=t_chunk)   # (Sp, Bp, D)
    h = jnp.transpose(h[:S, :B], (1, 0, 2)).reshape(B * S, D)

    # --- LayerNorm + tied-weight projection (rows x vocab tiled GEMM) ---
    N = B * S
    if N <= row_tile_max:
        row_tile = _round_up(N, 8)
        Np = row_tile
    else:
        row_tile = row_tile_max
        Np = _round_up(N, row_tile)
    h = jnp.pad(h, ((0, Np - N), (0, 0)))

    Vp = prep["W_e_t_pad"].shape[1]
    col_tile = Vp
    for cand in (col_tile_max, 256, 128):
        if Vp % cand == 0:
            col_tile = cand
            break

    logits = ln_fc(h, prep["gamma"], prep["beta"], prep["W_e_t_pad"],
                   prep["b_fc_pad"], row_tile=row_tile, col_tile=col_tile)
    return logits[:N, :V].reshape(B, S, V)


# ----------------------------------------------------------------------------
# Pure-JAX reference (correctness check)
# ----------------------------------------------------------------------------
def forward_ref(idx, params):
    h = jnp.take(params["W_e"], idx, axis=0)          # (B, S, D)
    B, S, D = h.shape
    for l in range(params["n_layers"]):
        w_ih, w_hh = params["w_ih"][l], params["w_hh"][l]
        b_ih, b_hh = params["b_ih"][l], params["b_hh"][l]
        h_t = jnp.zeros((B, D), jnp.float32)
        outs = []
        for t in range(S):
            x_t = h[:, t, :]
            gx = x_t @ w_ih.T + b_ih
            gh = h_t @ w_hh.T + b_hh
            r = jax.nn.sigmoid(gx[:, :D] + gh[:, :D])
            z = jax.nn.sigmoid(gx[:, D:2 * D] + gh[:, D:2 * D])
            n = jnp.tanh(gx[:, 2 * D:] + r * gh[:, 2 * D:])
            h_t = (1.0 - z) * n + z * h_t
            outs.append(h_t)
        h = jnp.stack(outs, axis=1)
    mu = h.mean(-1, keepdims=True)
    var = ((h - mu) ** 2).mean(-1, keepdims=True)
    hn = (h - mu) / jnp.sqrt(var + 1e-5) * params["gamma"] + params["beta"]
    return hn @ params["W_e"].T + params["b_fc"]


# ----------------------------------------------------------------------------
# Deterministic parameter init + demo
# ----------------------------------------------------------------------------
def init_params(key, n_items, dim_hidden, n_layers):
    V = n_items + 1
    D = dim_hidden
    keys = jax.random.split(key, 3 + 4 * n_layers)
    W_e = 0.1 * jax.random.normal(keys[0], (V, D), jnp.float32)
    W_e = W_e.at[0].set(0.0)                          # padding_idx=0
    bound = 1.0 / np.sqrt(D)
    w_ih, w_hh, b_ih, b_hh = [], [], [], []
    for l in range(n_layers):
        k0, k1, k2, k3 = keys[3 + 4 * l: 3 + 4 * (l + 1)]
        w_ih.append(jax.random.uniform(k0, (3 * D, D), jnp.float32, -bound, bound))
        w_hh.append(jax.random.uniform(k1, (3 * D, D), jnp.float32, -bound, bound))
        b_ih.append(jax.random.uniform(k2, (3 * D,), jnp.float32, -bound, bound))
        b_hh.append(jax.random.uniform(k3, (3 * D,), jnp.float32, -bound, bound))
    return dict(
        W_e=W_e, w_ih=w_ih, w_hh=w_hh, b_ih=b_ih, b_hh=b_hh,
        gamma=jnp.ones((D,), jnp.float32),
        beta=jnp.zeros((D,), jnp.float32),
        b_fc=jax.random.uniform(keys[1], (V,), jnp.float32, -bound, bound),
        n_layers=n_layers,
    )


if __name__ == "__main__":
    # Small shapes consistent with the module (dim_hidden scaled down to 128).
    # n_items=200 -> vocab 201, padded to 256 (exercises the vocab padding).
    B, S = 8, 8
    n_items, dim_hidden, n_layers = 200, 128, 4

    key = jax.random.PRNGKey(0)
    k_param, k_idx = jax.random.split(key)
    params = init_params(k_param, n_items, dim_hidden, n_layers)
    prep = prepare_params(params)
    idx = jax.random.randint(k_idx, (B, S), 0, n_items + 1, dtype=jnp.int32)

    fwd = jax.jit(lambda i: forward_pallas(i, prep))
    logits = jax.block_until_ready(fwd(idx))

    ref = forward_ref(idx, params)
    np.testing.assert_allclose(np.asarray(logits), np.asarray(ref),
                               rtol=5e-2, atol=5e-2)
    assert logits.shape == (B, S, n_items + 1)
    assert np.all(np.isfinite(np.asarray(logits)))
    print("KERNEL_OK")
</pallas_src>

<mosaic_0001>
module attributes {stable_mosaic.version = 11 : i64} {
  func.func @_gru_stack_kernel(%arg0: i32, %arg1: memref<8x8x128xf32, #tpu.memory_space<vmem>>, %arg2: memref<4x128x384xf32, #tpu.memory_space<vmem>>, %arg3: memref<4x128x384xf32, #tpu.memory_space<vmem>>, %arg4: memref<4x1x384xf32, #tpu.memory_space<vmem>>, %arg5: memref<4x1x128xf32, #tpu.memory_space<vmem>>, %arg6: memref<8x8x128xf32, #tpu.memory_space<vmem>>, %arg7: memref<8x8x128xf32, #tpu.memory_space<vmem>>, %arg8: memref<8x8x128xf32, #tpu.memory_space<vmem>>, %arg9: memref<8x8x384xf32, #tpu.memory_space<vmem>>, %arg10: memref<8x128xf32, #tpu.memory_space<vmem>>) attributes {dimension_semantics = [#tpu.dimension_semantics<parallel>], iteration_bounds = array<i64: 1>, scalar_prefetch = 0 : i64, scratch_operands = 4 : i64, tpu.core_type = #tpu.core_type<tc>, window_params = [{transform_indices = @transform_0, window_bounds = array<i64: 8, 8, 128>}, {pipeline_mode = #tpu.pipeline_mode<synchronous>, transform_indices = @transform_1, window_bounds = array<i64: 4, 128, 384>}, {pipeline_mode = #tpu.pipeline_mode<synchronous>, transform_indices = @transform_2, window_bounds = array<i64: 4, 128, 384>}, {pipeline_mode = #tpu.pipeline_mode<synchronous>, transform_indices = @transform_3, window_bounds = array<i64: 4, 1, 384>}, {pipeline_mode = #tpu.pipeline_mode<synchronous>, transform_indices = @transform_4, window_bounds = array<i64: 4, 1, 128>}, {transform_indices = @transform_5, window_bounds = array<i64: 8, 8, 128>}]} {
    %cst = arith.constant 0.000000e+00 : f32
    %0 = vector.broadcast %cst : f32 to vector<8x128xf32>
    %c0 = arith.constant 0 : index
    %c0_0 = arith.constant 0 : index
    %1 = vector.load %arg10[%c0, %c0_0] : memref<8x128xf32, #tpu.memory_space<vmem>>, vector<8x128xf32>
    tpu.vector_store %arg10[%c0, %c0_0], %0 {strides = array<i32>} : memref<8x128xf32, #tpu.memory_space<vmem>>, vector<8x128xf32>,
    %c0_i32 = arith.constant 0 : i32
    %c8_i32 = arith.constant 8 : i32
    %2 = arith.muli %c0_i32, %c8_i32 : i32
    %3 = tpu.assume_multiple %2, 8 : i32
    %4 = arith.index_cast %3 : i32 to index
    %c0_1 = arith.constant 0 : index
    %c0_2 = arith.constant 0 : index
    %5 = vector.load %arg1[%4, %c0_1, %c0_2] : memref<8x8x128xf32, #tpu.memory_space<vmem>>, vector<8x8x128xf32>
    %6 = vector.shape_cast %5 : vector<8x8x128xf32> to vector<64x128xf32>
    %c0_3 = arith.constant 0 : index
    %c0_4 = arith.constant 0 : index
    %c0_5 = arith.constant 0 : index
    %7 = vector.load %arg2[%c0_3, %c0_4, %c0_5] : memref<4x128x384xf32, #tpu.memory_space<vmem>>, vector<1x128x384xf32>
    %8 = vector.shape_cast %7 : vector<1x128x384xf32> to vector<128x384xf32>
    %cst_6 = arith.constant dense<0.000000e+00> : vector<64x384xf32>
    %9 = tpu.matmul %6, %8, %cst_6 {dimension_numbers = #tpu.dot_dimension_numbers<[1], [0], [0], [1], [0, 0, 1, 1], [], []>} : vector<64x128xf32>, vector<128x384xf32>, vector<64x384xf32> -> vector<64x384xf32>
    %c0_7 = arith.constant 0 : index
    %c0_8 = arith.constant 0 : index
    %c0_9 = arith.constant 0 : index
    %10 = vector.load %arg4[%c0_7, %c0_8, %c0_9] : memref<4x1x384xf32, #tpu.memory_space<vmem>>, vector<1x1x384xf32>
    %11 = vector.shape_cast %10 : vector<1x1x384xf32> to vector<1x384xf32>
    %12 = vector.broadcast %11 : vector<1x384xf32> to vector<64x384xf32>
    %13 = arith.addf %9, %12 : vector<64x384xf32>
    %14 = vector.shape_cast %13 : vector<64x384xf32> to vector<8x8x384xf32>
    %c0_10 = arith.constant 0 : index
    %c0_11 = arith.constant 0 : index
    %c0_12 = arith.constant 0 : index
    %15 = vector.load %arg9[%c0_10, %c0_11, %c0_12] : memref<8x8x384xf32, #tpu.memory_space<vmem>>, vector<8x8x384xf32>
    tpu.vector_store %arg9[%c0_10, %c0_11, %c0_12], %14 {strides = array<i32>} : memref<8x8x384xf32, #tpu.memory_space<vmem>>, vector<8x8x384xf32>,
    %c0_i32_13 = arith.constant 0 : i32
    %c8_i32_14 = arith.constant 8 : i32
    %16 = arith.addi %c0_i32_13, %c8_i32_14 : i32
    %c1_i32 = arith.constant 1 : i32
    scf.for %arg11 = %c0_i32_13 to %16 step %c1_i32  : i32 {
      %c0_80 = arith.constant 0 : index
      %c0_81 = arith.constant 0 : index
      %68 = vector.load %arg10[%c0_80, %c0_81] : memref<8x128xf32, #tpu.memory_space<vmem>>, vector<8x128xf32>
      %69 = arith.index_cast %arg11 : i32 to index
      %c0_82 = arith.constant 0 : index
      %c0_83 = arith.constant 0 : index
      %70 = vector.load %arg9[%69, %c0_82, %c0_83] : memref<8x8x384xf32, #tpu.memory_space<vmem>>, vector<1x8x384xf32>
      %71 = vector.shape_cast %70 : vector<1x8x384xf32> to vector<8x384xf32>
      %c0_84 = arith.constant 0 : index
      %c0_85 = arith.constant 0 : index
      %c0_86 = arith.constant 0 : index
      %72 = vector.load %arg3[%c0_84, %c0_85, %c0_86] : memref<4x128x384xf32, #tpu.memory_space<vmem>>, vector<1x128x384xf32>
      %73 = vector.shape_cast %72 : vector<1x128x384xf32> to vector<128x384xf32>
      %cst_87 = arith.constant dense<0.000000e+00> : vector<8x384xf32>
      %74 = tpu.matmul %68, %73, %cst_87 {dimension_numbers = #tpu.dot_dimension_numbers<[1], [0], [0], [1], [0, 0, 1, 1], [], []>} : vector<8x128xf32>, vector<128x384xf32>, vector<8x384xf32> -> vector<8x384xf32>
      %75 = vector.extract_strided_slice %71 {offsets = [0, 0], sizes = [8, 128], strides = [1, 1]} : vector<8x384xf32> to vector<8x128xf32>
      %76 = vector.extract_strided_slice %74 {offsets = [0, 0], sizes = [8, 128], strides = [1, 1]} : vector<8x384xf32> to vector<8x128xf32>
      %77 = arith.addf %75, %76 : vector<8x128xf32>
      %78 = arith.negf %77 : vector<8x128xf32>
      %79 = math.exp %78 : vector<8x128xf32>
      %cst_88 = arith.constant 1.000000e+00 : f32
      %80 = vector.broadcast %cst_88 : f32 to vector<8x128xf32>
      %81 = arith.addf %80, %79 : vector<8x128xf32>
      %82 = arith.divf %80, %81 : vector<8x128xf32>
      %83 = vector.extract_strided_slice %71 {offsets = [0, 128], sizes = [8, 128], strides = [1, 1]} : vector<8x384xf32> to vector<8x128xf32>
      %84 = vector.extract_strided_slice %74 {offsets = [0, 128], sizes = [8, 128], strides = [1, 1]} : vector<8x384xf32> to vector<8x128xf32>
      %85 = arith.addf %83, %84 : vector<8x128xf32>
      %86 = arith.negf %85 : vector<8x128xf32>
      %87 = math.exp %86 : vector<8x128xf32>
      %cst_89 = arith.constant 1.000000e+00 : f32
      %88 = vector.broadcast %cst_89 : f32 to vector<8x128xf32>
      %89 = arith.addf %88, %87 : vector<8x128xf32>
      %90 = arith.divf %88, %89 : vector<8x128xf32>
      %91 = vector.extract_strided_slice %71 {offsets = [0, 256], sizes = [8, 128], strides = [1, 1]} : vector<8x384xf32> to vector<8x128xf32>
      %92 = vector.extract_strided_slice %74 {offsets = [0, 256], sizes = [8, 128], strides = [1, 1]} : vector<8x384xf32> to vector<8x128xf32>
      %c0_90 = arith.constant 0 : index
      %c0_91 = arith.constant 0 : index
      %c0_92 = arith.constant 0 : index
      %93 = vector.load %arg5[%c0_90, %c0_91, %c0_92] : memref<4x1x128xf32, #tpu.memory_space<vmem>>, vector<1x1x128xf32>
      %94 = vector.shape_cast %93 : vector<1x1x128xf32> to vector<1x128xf32>
      %95 = vector.broadcast %94 : vector<1x128xf32> to vector<8x128xf32>
      %96 = arith.addf %92, %95 : vector<8x128xf32>
      %97 = arith.mulf %82, %96 : vector<8x128xf32>
      %98 = arith.addf %91, %97 : vector<8x128xf32>
      %99 = math.tanh %98 : vector<8x128xf32>
      %cst_93 = arith.constant 1.000000e+00 : f32
      %100 = vector.broadcast %cst_93 : f32 to vector<8x128xf32>
      %101 = arith.subf %100, %90 : vector<8x128xf32>
      %102 = arith.mulf %101, %99 : vector<8x128xf32>
      %103 = arith.mulf %90, %68 : vector<8x128xf32>
      %104 = arith.addf %102, %103 : vector<8x128xf32>
      %c0_94 = arith.constant 0 : index
      %c0_95 = arith.constant 0 : index
      %105 = vector.load %arg10[%c0_94, %c0_95] : memref<8x128xf32, #tpu.memory_space<vmem>>, vector<8x128xf32>
      tpu.vector_store %arg10[%c0_94, %c0_95], %104 {strides = array<i32>} : memref<8x128xf32, #tpu.memory_space<vmem>>, vector<8x128xf32>,
      %106 = arith.addi %3, %arg11 : i32
      %107 = arith.index_cast %106 : i32 to index
      %c0_96 = arith.constant 0 : index
      %c0_97 = arith.constant 0 : index
      %108 = vector.load %arg7[%107, %c0_96, %c0_97] : memref<8x8x128xf32, #tpu.memory_space<vmem>>, vector<1x8x128xf32>
      %109 = vector.shape_cast %108 : vector<1x8x128xf32> to vector<8x128xf32>
      %110 = vector.shape_cast %104 : vector<8x128xf32> to vector<1x8x128xf32>
      tpu.vector_store %arg7[%107, %c0_96, %c0_97], %110 {strides = array<i32>} : memref<8x8x128xf32, #tpu.memory_space<vmem>>, vector<1x8x128xf32>,
    }
    %c8_i32_15 = arith.constant 8 : i32
    %c1_i32_16 = arith.constant 1 : i32
    %cst_17 = arith.constant 0.000000e+00 : f32
    %17 = vector.broadcast %cst_17 : f32 to vector<8x128xf32>
    %c0_18 = arith.constant 0 : index
    %c0_19 = arith.constant 0 : index
    %18 = vector.load %arg10[%c0_18, %c0_19] : memref<8x128xf32, #tpu.memory_space<vmem>>, vector<8x128xf32>
    tpu.vector_store %arg10[%c0_18, %c0_19], %17 {strides = array<i32>} : memref<8x128xf32, #tpu.memory_space<vmem>>, vector<8x128xf32>,
    %c0_i32_20 = arith.constant 0 : i32
    %c8_i32_21 = arith.constant 8 : i32
    %19 = arith.muli %c0_i32_20, %c8_i32_21 : i32
    %20 = tpu.assume_multiple %19, 8 : i32
    %21 = arith.index_cast %20 : i32 to index
    %c0_22 = arith.constant 0 : index
    %c0_23 = arith.constant 0 : index
    %22 = vector.load %arg7[%21, %c0_22, %c0_23] : memref<8x8x128xf32, #tpu.memory_space<vmem>>, vector<8x8x128xf32>
    %23 = vector.shape_cast %22 : vector<8x8x128xf32> to vector<64x128xf32>
    %c1 = arith.constant 1 : index
    %c0_24 = arith.constant 0 : index
    %c0_25 = arith.constant 0 : index
    %24 = vector.load %arg2[%c1, %c0_24, %c0_25] : memref<4x128x384xf32, #tpu.memory_space<vmem>>, vector<1x128x384xf32>
    %25 = vector.shape_cast %24 : vector<1x128x384xf32> to vector<128x384xf32>
    %cst_26 = arith.constant dense<0.000000e+00> : vector<64x384xf32>
    %26 = tpu.matmul %23, %25, %cst_26 {dimension_numbers = #tpu.dot_dimension_numbers<[1], [0], [0], [1], [0, 0, 1, 1], [], []>} : vector<64x128xf32>, vector<128x384xf32>, vector<64x384xf32> -> vector<64x384xf32>
    %c1_27 = arith.constant 1 : index
    %c0_28 = arith.constant 0 : index
    %c0_29 = arith.constant 0 : index
    %27 = vector.load %arg4[%c1_27, %c0_28, %c0_29] : memref<4x1x384xf32, #tpu.memory_space<vmem>>, vector<1x1x384xf32>
    %28 = vector.shape_cast %27 : vector<1x1x384xf32> to vector<1x384xf32>
    %29 = vector.broadcast %28 : vector<1x384xf32> to vector<64x384xf32>
    %30 = arith.addf %26, %29 : vector<64x384xf32>
    %31 = vector.shape_cast %30 : vector<64x384xf32> to vector<8x8x384xf32>
    %c0_30 = arith.constant 0 : index
    %c0_31 = arith.constant 0 : index
    %c0_32 = arith.constant 0 : index
    %32 = vector.load %arg9[%c0_30, %c0_31, %c0_32] : memref<8x8x384xf32, #tpu.memory_space<vmem>>, vector<8x8x384xf32>
    tpu.vector_store %arg9[%c0_30, %c0_31, %c0_32], %31 {strides = array<i32>} : memref<8x8x384xf32, #tpu.memory_space<vmem>>, vector<8x8x384xf32>,
    %c0_i32_33 = arith.constant 0 : i32
    %c8_i32_34 = arith.constant 8 : i32
    %33 = arith.addi %c0_i32_33, %c8_i32_34 : i32
    %c1_i32_35 = arith.constant 1 : i32
    scf.for %arg11 = %c0_i32_33 to %33 step %c1_i32_35  : i32 {
      %c0_80 = arith.constant 0 : index
      %c0_81 = arith.constant 0 : index
      %68 = vector.load %arg10[%c0_80, %c0_81] : memref<8x128xf32, #tpu.memory_space<vmem>>, vector<8x128xf32>
      %69 = arith.index_cast %arg11 : i32 to index
      %c0_82 = arith.constant 0 : index
      %c0_83 = arith.constant 0 : index
      %70 = vector.load %arg9[%69, %c0_82, %c0_83] : memref<8x8x384xf32, #tpu.memory_space<vmem>>, vector<1x8x384xf32>
      %71 = vector.shape_cast %70 : vector<1x8x384xf32> to vector<8x384xf32>
      %c1_84 = arith.constant 1 : index
      %c0_85 = arith.constant 0 : index
      %c0_86 = arith.constant 0 : index
      %72 = vector.load %arg3[%c1_84, %c0_85, %c0_86] : memref<4x128x384xf32, #tpu.memory_space<vmem>>, vector<1x128x384xf32>
      %73 = vector.shape_cast %72 : vector<1x128x384xf32> to vector<128x384xf32>
      %cst_87 = arith.constant dense<0.000000e+00> : vector<8x384xf32>
      %74 = tpu.matmul %68, %73, %cst_87 {dimension_numbers = #tpu.dot_dimension_numbers<[1], [0], [0], [1], [0, 0, 1, 1], [], []>} : vector<8x128xf32>, vector<128x384xf32>, vector<8x384xf32> -> vector<8x384xf32>
      %75 = vector.extract_strided_slice %71 {offsets = [0, 0], sizes = [8, 128], strides = [1, 1]} : vector<8x384xf32> to vector<8x128xf32>
      %76 = vector.extract_strided_slice %74 {offsets = [0, 0], sizes = [8, 128], strides = [1, 1]} : vector<8x384xf32> to vector<8x128xf32>
      %77 = arith.addf %75, %76 : vector<8x128xf32>
      %78 = arith.negf %77 : vector<8x128xf32>
      %79 = math.exp %78 : vector<8x128xf32>
      %cst_88 = arith.constant 1.000000e+00 : f32
      %80 = vector.broadcast %cst_88 : f32 to vector<8x128xf32>
      %81 = arith.addf %80, %79 : vector<8x128xf32>
      %82 = arith.divf %80, %81 : vector<8x128xf32>
      %83 = vector.extract_strided_slice %71 {offsets = [0, 128], sizes = [8, 128], strides = [1, 1]} : vector<8x384xf32> to vector<8x128xf32>
      %84 = vector.extract_strided_slice %74 {offsets = [0, 128], sizes = [8, 128], strides = [1, 1]} : vector<8x384xf32> to vector<8x128xf32>
      %85 = arith.addf %83, %84 : vector<8x128xf32>
      %86 = arith.negf %85 : vector<8x128xf32>
      %87 = math.exp %86 : vector<8x128xf32>
      %cst_89 = arith.constant 1.000000e+00 : f32
      %88 = vector.broadcast %cst_89 : f32 to vector<8x128xf32>
      %89 = arith.addf %88, %87 : vector<8x128xf32>
      %90 = arith.divf %88, %89 : vector<8x128xf32>
      %91 = vector.extract_strided_slice %71 {offsets = [0, 256], sizes = [8, 128], strides = [1, 1]} : vector<8x384xf32> to vector<8x128xf32>
      %92 = vector.extract_strided_slice %74 {offsets = [0, 256], sizes = [8, 128], strides = [1, 1]} : vector<8x384xf32> to vector<8x128xf32>
      %c1_90 = arith.constant 1 : index
      %c0_91 = arith.constant 0 : index
      %c0_92 = arith.constant 0 : index
      %93 = vector.load %arg5[%c1_90, %c0_91, %c0_92] : memref<4x1x128xf32, #tpu.memory_space<vmem>>, vector<1x1x128xf32>
      %94 = vector.shape_cast %93 : vector<1x1x128xf32> to vector<1x128xf32>
      %95 = vector.broadcast %94 : vector<1x128xf32> to vector<8x128xf32>
      %96 = arith.addf %92, %95 : vector<8x128xf32>
      %97 = arith.mulf %82, %96 : vector<8x128xf32>
      %98 = arith.addf %91, %97 : vector<8x128xf32>
      %99 = math.tanh %98 : vector<8x128xf32>
      %cst_93 = arith.constant 1.000000e+00 : f32
      %100 = vector.broadcast %cst_93 : f32 to vector<8x128xf32>
      %101 = arith.subf %100, %90 : vector<8x128xf32>
      %102 = arith.mulf %101, %99 : vector<8x128xf32>
      %103 = arith.mulf %90, %68 : vector<8x128xf32>
      %104 = arith.addf %102, %103 : vector<8x128xf32>
      %c0_94 = arith.constant 0 : index
      %c0_95 = arith.constant 0 : index
      %105 = vector.load %arg10[%c0_94, %c0_95] : memref<8x128xf32, #tpu.memory_space<vmem>>, vector<8x128xf32>
      tpu.vector_store %arg10[%c0_94, %c0_95], %104 {strides = array<i32>} : memref<8x128xf32, #tpu.memory_space<vmem>>, vector<8x128xf32>,
      %106 = arith.addi %20, %arg11 : i32
      %107 = arith.index_cast %106 : i32 to index
      %c0_96 = arith.constant 0 : index
      %c0_97 = arith.constant 0 : index
      %108 = vector.load %arg8[%107, %c0_96, %c0_97] : memref<8x8x128xf32, #tpu.memory_space<vmem>>, vector<1x8x128xf32>
      %109 = vector.shape_cast %108 : vector<1x8x128xf32> to vector<8x128xf32>
      %110 = vector.shape_cast %104 : vector<8x128xf32> to vector<1x8x128xf32>
      tpu.vector_store %arg8[%107, %c0_96, %c0_97], %110 {strides = array<i32>} : memref<8x8x128xf32, #tpu.memory_space<vmem>>, vector<1x8x128xf32>,
    }
    %c8_i32_36 = arith.constant 8 : i32
    %c1_i32_37 = arith.constant 1 : i32
    %cst_38 = arith.constant 0.000000e+00 : f32
    %34 = vector.broadcast %cst_38 : f32 to vector<8x128xf32>
    %c0_39 = arith.constant 0 : index
    %c0_40 = arith.constant 0 : index
    %35 = vector.load %arg10[%c0_39, %c0_40] : memref<8x128xf32, #tpu.memory_space<vmem>>, vector<8x128xf32>
    tpu.vector_store %arg10[%c0_39, %c0_40], %34 {strides = array<i32>} : memref<8x128xf32, #tpu.memory_space<vmem>>, vector<8x128xf32>,
    %c0_i32_41 = arith.constant 0 : i32
    %c8_i32_42 = arith.constant 8 : i32
    %36 = arith.muli %c0_i32_41, %c8_i32_42 : i32
    %37 = tpu.assume_multiple %36, 8 : i32
    %38 = arith.index_cast %37 : i32 to index
    %c0_43 = arith.constant 0 : index
    %c0_44 = arith.constant 0 : index
    %39 = vector.load %arg8[%38, %c0_43, %c0_44] : memref<8x8x128xf32, #tpu.memory_space<vmem>>, vector<8x8x128xf32>
    %40 = vector.shape_cast %39 : vector<8x8x128xf32> to vector<64x128xf32>
    %c2 = arith.constant 2 : index
    %c0_45 = arith.constant 0 : index
    %c0_46 = arith.constant 0 : index
    %41 = vector.load %arg2[%c2, %c0_45, %c0_46] : memref<4x128x384xf32, #tpu.memory_space<vmem>>, vector<1x128x384xf32>
    %42 = vector.shape_cast %41 : vector<1x128x384xf32> to vector<128x384xf32>
    %cst_47 = arith.constant dense<0.000000e+00> : vector<64x384xf32>
    %43 = tpu.matmul %40, %42, %cst_47 {dimension_numbers = #tpu.dot_dimension_numbers<[1], [0], [0], [1], [0, 0, 1, 1], [], []>} : vector<64x128xf32>, vector<128x384xf32>, vector<64x384xf32> -> vector<64x384xf32>
    %c2_48 = arith.constant 2 : index
    %c0_49 = arith.constant 0 : index
    %c0_50 = arith.constant 0 : index
    %44 = vector.load %arg4[%c2_48, %c0_49, %c0_50] : memref<4x1x384xf32, #tpu.memory_space<vmem>>, vector<1x1x384xf32>
    %45 = vector.shape_cast %44 : vector<1x1x384xf32> to vector<1x384xf32>
    %46 = vector.broadcast %45 : vector<1x384xf32> to vector<64x384xf32>
    %47 = arith.addf %43, %46 : vector<64x384xf32>
    %48 = vector.shape_cast %47 : vector<64x384xf32> to vector<8x8x384xf32>
    %c0_51 = arith.constant 0 : index
    %c0_52 = arith.constant 0 : index
    %c0_53 = arith.constant 0 : index
    %49 = vector.load %arg9[%c0_51, %c0_52, %c0_53] : memref<8x8x384xf32, #tpu.memory_space<vmem>>, vector<8x8x384xf32>
    tpu.vector_store %arg9[%c0_51, %c0_52, %c0_53], %48 {strides = array<i32>} : memref<8x8x384xf32, #tpu.memory_space<vmem>>, vector<8x8x384xf32>,
    %c0_i32_54 = arith.constant 0 : i32
    %c8_i32_55 = arith.constant 8 : i32
    %50 = arith.addi %c0_i32_54, %c8_i32_55 : i32
    %c1_i32_56 = arith.constant 1 : i32
    scf.for %arg11 = %c0_i32_54 to %50 step %c1_i32_56  : i32 {
      %c0_80 = arith.constant 0 : index
      %c0_81 = arith.constant 0 : index
      %68 = vector.load %arg10[%c0_80, %c0_81] : memref<8x128xf32, #tpu.memory_space<vmem>>, vector<8x128xf32>
      %69 = arith.index_cast %arg11 : i32 to index
      %c0_82 = arith.constant 0 : index
      %c0_83 = arith.constant 0 : index
      %70 = vector.load %arg9[%69, %c0_82, %c0_83] : memref<8x8x384xf32, #tpu.memory_space<vmem>>, vector<1x8x384xf32>
      %71 = vector.shape_cast %70 : vector<1x8x384xf32> to vector<8x384xf32>
      %c2_84 = arith.constant 2 : index
      %c0_85 = arith.constant 0 : index
      %c0_86 = arith.constant 0 : index
      %72 = vector.load %arg3[%c2_84, %c0_85, %c0_86] : memref<4x128x384xf32, #tpu.memory_space<vmem>>, vector<1x128x384xf32>
      %73 = vector.shape_cast %72 : vector<1x128x384xf32> to vector<128x384xf32>
      %cst_87 = arith.constant dense<0.000000e+00> : vector<8x384xf32>
      %74 = tpu.matmul %68, %73, %cst_87 {dimension_numbers = #tpu.dot_dimension_numbers<[1], [0], [0], [1], [0, 0, 1, 1], [], []>} : vector<8x128xf32>, vector<128x384xf32>, vector<8x384xf32> -> vector<8x384xf32>
      %75 = vector.extract_strided_slice %71 {offsets = [0, 0], sizes = [8, 128], strides = [1, 1]} : vector<8x384xf32> to vector<8x128xf32>
      %76 = vector.extract_strided_slice %74 {offsets = [0, 0], sizes = [8, 128], strides = [1, 1]} : vector<8x384xf32> to vector<8x128xf32>
      %77 = arith.addf %75, %76 : vector<8x128xf32>
      %78 = arith.negf %77 : vector<8x128xf32>
      %79 = math.exp %78 : vector<8x128xf32>
      %cst_88 = arith.constant 1.000000e+00 : f32
      %80 = vector.broadcast %cst_88 : f32 to vector<8x128xf32>
      %81 = arith.addf %80, %79 : vector<8x128xf32>
      %82 = arith.divf %80, %81 : vector<8x128xf32>
      %83 = vector.extract_strided_slice %71 {offsets = [0, 128], sizes = [8, 128], strides = [1, 1]} : vector<8x384xf32> to vector<8x128xf32>
      %84 = vector.extract_strided_slice %74 {offsets = [0, 128], sizes = [8, 128], strides = [1, 1]} : vector<8x384xf32> to vector<8x128xf32>
      %85 = arith.addf %83, %84 : vector<8x128xf32>
      %86 = arith.negf %85 : vector<8x128xf32>
      %87 = math.exp %86 : vector<8x128xf32>
      %cst_89 = arith.constant 1.000000e+00 : f32
      %88 = vector.broadcast %cst_89 : f32 to vector<8x128xf32>
      %89 = arith.addf %88, %87 : vector<8x128xf32>
      %90 = arith.divf %88, %89 : vector<8x128xf32>
      %91 = vector.extract_strided_slice %71 {offsets = [0, 256], sizes = [8, 128], strides = [1, 1]} : vector<8x384xf32> to vector<8x128xf32>
      %92 = vector.extract_strided_slice %74 {offsets = [0, 256], sizes = [8, 128], strides = [1, 1]} : vector<8x384xf32> to vector<8x128xf32>
      %c2_90 = arith.constant 2 : index
      %c0_91 = arith.constant 0 : index
      %c0_92 = arith.constant 0 : index
      %93 = vector.load %arg5[%c2_90, %c0_91, %c0_92] : memref<4x1x128xf32, #tpu.memory_space<vmem>>, vector<1x1x128xf32>
      %94 = vector.shape_cast %93 : vector<1x1x128xf32> to vector<1x128xf32>
      %95 = vector.broadcast %94 : vector<1x128xf32> to vector<8x128xf32>
      %96 = arith.addf %92, %95 : vector<8x128xf32>
      %97 = arith.mulf %82, %96 : vector<8x128xf32>
      %98 = arith.addf %91, %97 : vector<8x128xf32>
      %99 = math.tanh %98 : vector<8x128xf32>
      %cst_93 = arith.constant 1.000000e+00 : f32
      %100 = vector.broadcast %cst_93 : f32 to vector<8x128xf32>
      %101 = arith.subf %100, %90 : vector<8x128xf32>
      %102 = arith.mulf %101, %99 : vector<8x128xf32>
      %103 = arith.mulf %90, %68 : vector<8x128xf32>
      %104 = arith.addf %102, %103 : vector<8x128xf32>
      %c0_94 = arith.constant 0 : index
      %c0_95 = arith.constant 0 : index
      %105 = vector.load %arg10[%c0_94, %c0_95] : memref<8x128xf32, #tpu.memory_space<vmem>>, vector<8x128xf32>
      tpu.vector_store %arg10[%c0_94, %c0_95], %104 {strides = array<i32>} : memref<8x128xf32, #tpu.memory_space<vmem>>, vector<8x128xf32>,
      %106 = arith.addi %37, %arg11 : i32
      %107 = arith.index_cast %106 : i32 to index
      %c0_96 = arith.constant 0 : index
      %c0_97 = arith.constant 0 : index
      %108 = vector.load %arg7[%107, %c0_96, %c0_97] : memref<8x8x128xf32, #tpu.memory_space<vmem>>, vector<1x8x128xf32>
      %109 = vector.shape_cast %108 : vector<1x8x128xf32> to vector<8x128xf32>
      %110 = vector.shape_cast %104 : vector<8x128xf32> to vector<1x8x128xf32>
      tpu.vector_store %arg7[%107, %c0_96, %c0_97], %110 {strides = array<i32>} : memref<8x8x128xf32, #tpu.memory_space<vmem>>, vector<1x8x128xf32>,
    }
    %c8_i32_57 = arith.constant 8 : i32
    %c1_i32_58 = arith.constant 1 : i32
    %cst_59 = arith.constant 0.000000e+00 : f32
    %51 = vector.broadcast %cst_59 : f32 to vector<8x128xf32>
    %c0_60 = arith.constant 0 : index
    %c0_61 = arith.constant 0 : index
    %52 = vector.load %arg10[%c0_60, %c0_61] : memref<8x128xf32, #tpu.memory_space<vmem>>, vector<8x128xf32>
    tpu.vector_store %arg10[%c0_60, %c0_61], %51 {strides = array<i32>} : memref<8x128xf32, #tpu.memory_space<vmem>>, vector<8x128xf32>,
    %c0_i32_62 = arith.constant 0 : i32
    %c8_i32_63 = arith.constant 8 : i32
    %53 = arith.muli %c0_i32_62, %c8_i32_63 : i32
    %54 = tpu.assume_multiple %53, 8 : i32
    %55 = arith.index_cast %54 : i32 to index
    %c0_64 = arith.constant 0 : index
    %c0_65 = arith.constant 0 : index
    %56 = vector.load %arg7[%55, %c0_64, %c0_65] : memref<8x8x128xf32, #tpu.memory_space<vmem>>, vector<8x8x128xf32>
    %57 = vector.shape_cast %56 : vector<8x8x128xf32> to vector<64x128xf32>
    %c3 = arith.constant 3 : index
    %c0_66 = arith.constant 0 : index
    %c0_67 = arith.constant 0 : index
    %58 = vector.load %arg2[%c3, %c0_66, %c0_67] : memref<4x128x384xf32, #tpu.memory_space<vmem>>, vector<1x128x384xf32>
    %59 = vector.shape_cast %58 : vector<1x128x384xf32> to vector<128x384xf32>
    %cst_68 = arith.constant dense<0.000000e+00> : vector<64x384xf32>
    %60 = tpu.matmul %57, %59, %cst_68 {dimension_numbers = #tpu.dot_dimension_numbers<[1], [0], [0], [1], [0, 0, 1, 1], [], []>} : vector<64x128xf32>, vector<128x384xf32>, vector<64x384xf32> -> vector<64x384xf32>
    %c3_69 = arith.constant 3 : index
    %c0_70 = arith.constant 0 : index
    %c0_71 = arith.constant 0 : index
    %61 = vector.load %arg4[%c3_69, %c0_70, %c0_71] : memref<4x1x384xf32, #tpu.memory_space<vmem>>, vector<1x1x384xf32>
    %62 = vector.shape_cast %61 : vector<1x1x384xf32> to vector<1x384xf32>
    %63 = vector.broadcast %62 : vector<1x384xf32> to vector<64x384xf32>
    %64 = arith.addf %60, %63 : vector<64x384xf32>
    %65 = vector.shape_cast %64 : vector<64x384xf32> to vector<8x8x384xf32>
    %c0_72 = arith.constant 0 : index
    %c0_73 = arith.constant 0 : index
    %c0_74 = arith.constant 0 : index
    %66 = vector.load %arg9[%c0_72, %c0_73, %c0_74] : memref<8x8x384xf32, #tpu.memory_space<vmem>>, vector<8x8x384xf32>
    tpu.vector_store %arg9[%c0_72, %c0_73, %c0_74], %65 {strides = array<i32>} : memref<8x8x384xf32, #tpu.memory_space<vmem>>, vector<8x8x384xf32>,
    %c0_i32_75 = arith.constant 0 : i32
    %c8_i32_76 = arith.constant 8 : i32
    %67 = arith.addi %c0_i32_75, %c8_i32_76 : i32
    %c1_i32_77 = arith.constant 1 : i32
    scf.for %arg11 = %c0_i32_75 to %67 step %c1_i32_77  : i32 {
      %c0_80 = arith.constant 0 : index
      %c0_81 = arith.constant 0 : index
      %68 = vector.load %arg10[%c0_80, %c0_81] : memref<8x128xf32, #tpu.memory_space<vmem>>, vector<8x128xf32>
      %69 = arith.index_cast %arg11 : i32 to index
      %c0_82 = arith.constant 0 : index
      %c0_83 = arith.constant 0 : index
      %70 = vector.load %arg9[%69, %c0_82, %c0_83] : memref<8x8x384xf32, #tpu.memory_space<vmem>>, vector<1x8x384xf32>
      %71 = vector.shape_cast %70 : vector<1x8x384xf32> to vector<8x384xf32>
      %c3_84 = arith.constant 3 : index
      %c0_85 = arith.constant 0 : index
      %c0_86 = arith.constant 0 : index
      %72 = vector.load %arg3[%c3_84, %c0_85, %c0_86] : memref<4x128x384xf32, #tpu.memory_space<vmem>>, vector<1x128x384xf32>
      %73 = vector.shape_cast %72 : vector<1x128x384xf32> to vector<128x384xf32>
      %cst_87 = arith.constant dense<0.000000e+00> : vector<8x384xf32>
      %74 = tpu.matmul %68, %73, %cst_87 {dimension_numbers = #tpu.dot_dimension_numbers<[1], [0], [0], [1], [0, 0, 1, 1], [], []>} : vector<8x128xf32>, vector<128x384xf32>, vector<8x384xf32> -> vector<8x384xf32>
      %75 = vector.extract_strided_slice %71 {offsets = [0, 0], sizes = [8, 128], strides = [1, 1]} : vector<8x384xf32> to vector<8x128xf32>
      %76 = vector.extract_strided_slice %74 {offsets = [0, 0], sizes = [8, 128], strides = [1, 1]} : vector<8x384xf32> to vector<8x128xf32>
      %77 = arith.addf %75, %76 : vector<8x128xf32>
      %78 = arith.negf %77 : vector<8x128xf32>
      %79 = math.exp %78 : vector<8x128xf32>
      %cst_88 = arith.constant 1.000000e+00 : f32
      %80 = vector.broadcast %cst_88 : f32 to vector<8x128xf32>
      %81 = arith.addf %80, %79 : vector<8x128xf32>
      %82 = arith.divf %80, %81 : vector<8x128xf32>
      %83 = vector.extract_strided_slice %71 {offsets = [0, 128], sizes = [8, 128], strides = [1, 1]} : vector<8x384xf32> to vector<8x128xf32>
      %84 = vector.extract_strided_slice %74 {offsets = [0, 128], sizes = [8, 128], strides = [1, 1]} : vector<8x384xf32> to vector<8x128xf32>
      %85 = arith.addf %83, %84 : vector<8x128xf32>
      %86 = arith.negf %85 : vector<8x128xf32>
      %87 = math.exp %86 : vector<8x128xf32>
      %cst_89 = arith.constant 1.000000e+00 : f32
      %88 = vector.broadcast %cst_89 : f32 to vector<8x128xf32>
      %89 = arith.addf %88, %87 : vector<8x128xf32>
      %90 = arith.divf %88, %89 : vector<8x128xf32>
      %91 = vector.extract_strided_slice %71 {offsets = [0, 256], sizes = [8, 128], strides = [1, 1]} : vector<8x384xf32> to vector<8x128xf32>
      %92 = vector.extract_strided_slice %74 {offsets = [0, 256], sizes = [8, 128], strides = [1, 1]} : vector<8x384xf32> to vector<8x128xf32>
      %c3_90 = arith.constant 3 : index
      %c0_91 = arith.constant 0 : index
      %c0_92 = arith.constant 0 : index
      %93 = vector.load %arg5[%c3_90, %c0_91, %c0_92] : memref<4x1x128xf32, #tpu.memory_space<vmem>>, vector<1x1x128xf32>
      %94 = vector.shape_cast %93 : vector<1x1x128xf32> to vector<1x128xf32>
      %95 = vector.broadcast %94 : vector<1x128xf32> to vector<8x128xf32>
      %96 = arith.addf %92, %95 : vector<8x128xf32>
      %97 = arith.mulf %82, %96 : vector<8x128xf32>
      %98 = arith.addf %91, %97 : vector<8x128xf32>
      %99 = math.tanh %98 : vector<8x128xf32>
      %cst_93 = arith.constant 1.000000e+00 : f32
      %100 = vector.broadcast %cst_93 : f32 to vector<8x128xf32>
      %101 = arith.subf %100, %90 : vector<8x128xf32>
      %102 = arith.mulf %101, %99 : vector<8x128xf32>
      %103 = arith.mulf %90, %68 : vector<8x128xf32>
      %104 = arith.addf %102, %103 : vector<8x128xf32>
      %c0_94 = arith.constant 0 : index
      %c0_95 = arith.constant 0 : index
      %105 = vector.load %arg10[%c0_94, %c0_95] : memref<8x128xf32, #tpu.memory_space<vmem>>, vector<8x128xf32>
      tpu.vector_store %arg10[%c0_94, %c0_95], %104 {strides = array<i32>} : memref<8x128xf32, #tpu.memory_space<vmem>>, vector<8x128xf32>,
      %106 = arith.addi %54, %arg11 : i32
      %107 = arith.index_cast %106 : i32 to index
      %c0_96 = arith.constant 0 : index
      %c0_97 = arith.constant 0 : index
      %108 = vector.load %arg6[%107, %c0_96, %c0_97] : memref<8x8x128xf32, #tpu.memory_space<vmem>>, vector<1x8x128xf32>
      %109 = vector.shape_cast %108 : vector<1x8x128xf32> to vector<8x128xf32>
      %110 = vector.shape_cast %104 : vector<8x128xf32> to vector<1x8x128xf32>
      tpu.vector_store %arg6[%107, %c0_96, %c0_97], %110 {strides = array<i32>} : memref<8x8x128xf32, #tpu.memory_space<vmem>>, vector<1x8x128xf32>,
    }
    %c8_i32_78 = arith.constant 8 : i32
    %c1_i32_79 = arith.constant 1 : i32
    return
  }
  func.func @transform_0(%arg0: i32) -> (i32, i32, i32) {
    %c0_i32 = arith.constant 0 : i32
    %c0_i32_0 = arith.constant 0 : i32
    %c0_i32_1 = arith.constant 0 : i32
    return %c0_i32, %arg0, %c0_i32_0 : i32, i32, i32
  }
  func.func @transform_1(%arg0: i32) -> (i32, i32, i32) {
    %c0_i32 = arith.constant 0 : i32
    %c0_i32_0 = arith.constant 0 : i32
    %c0_i32_1 = arith.constant 0 : i32
    %c0_i32_2 = arith.constant 0 : i32
    return %c0_i32, %c0_i32_0, %c0_i32_1 : i32, i32, i32
  }
  func.func @transform_2(%arg0: i32) -> (i32, i32, i32) {
    %c0_i32 = arith.constant 0 : i32
    %c0_i32_0 = arith.constant 0 : i32
    %c0_i32_1 = arith.constant 0 : i32
    %c0_i32_2 = arith.constant 0 : i32
    return %c0_i32, %c0_i32_0, %c0_i32_1 : i32, i32, i32
  }
  func.func @transform_3(%arg0: i32) -> (i32, i32, i32) {
    %c0_i32 = arith.constant 0 : i32
    %c0_i32_0 = arith.constant 0 : i32
    %c0_i32_1 = arith.constant 0 : i32
    %c0_i32_2 = arith.constant 0 : i32
    return %c0_i32, %c0_i32_0, %c0_i32_1 : i32, i32, i32
  }
  func.func @transform_4(%arg0: i32) -> (i32, i32, i32) {
    %c0_i32 = arith.constant 0 : i32
    %c0_i32_0 = arith.constant 0 : i32
    %c0_i32_1 = arith.constant 0 : i32
    %c0_i32_2 = arith.constant 0 : i32
    return %c0_i32, %c0_i32_0, %c0_i32_1 : i32, i32, i32
  }
  func.func @transform_5(%arg0: i32) -> (i32, i32, i32) {
    %c0_i32 = arith.constant 0 : i32
    %c0_i32_0 = arith.constant 0 : i32
    %c0_i32_1 = arith.constant 0 : i32
    return %c0_i32, %arg0, %c0_i32_0 : i32, i32, i32
  }
}

module attributes {stable_mosaic.version = 11 : i64} {
  func.func @_ln_fc_kernel(%arg0: i32, %arg1: i32, %arg2: memref<64x128xf32, #tpu.memory_space<vmem>>, %arg3: memref<1x128xf32, #tpu.memory_space<vmem>>, %arg4: memref<1x128xf32, #tpu.memory_space<vmem>>, %arg5: memref<128x256xf32, #tpu.memory_space<vmem>>, %arg6: memref<1x256xf32, #tpu.memory_space<vmem>>, %arg7: memref<64x256xf32, #tpu.memory_space<vmem>>) attributes {dimension_semantics = [#tpu.dimension_semantics<parallel>, #tpu.dimension_semantics<parallel>], iteration_bounds = array<i64: 1, 1>, scalar_prefetch = 0 : i64, scratch_operands = 0 : i64, tpu.core_type = #tpu.core_type<tc>, window_params = [{transform_indices = @transform_0, window_bounds = array<i64: 64, 128>}, {pipeline_mode = #tpu.pipeline_mode<synchronous>, transform_indices = @transform_1, window_bounds = array<i64: 1, 128>}, {pipeline_mode = #tpu.pipeline_mode<synchronous>, transform_indices = @transform_2, window_bounds = array<i64: 1, 128>}, {transform_indices = @transform_3, window_bounds = array<i64: 128, 256>}, {transform_indices = @transform_4, window_bounds = array<i64: 1, 256>}, {transform_indices = @transform_5, window_bounds = array<i64: 64, 256>}]} {
    %c0 = arith.constant 0 : index
    %c0_0 = arith.constant 0 : index
    %0 = vector.load %arg2[%c0, %c0_0] : memref<64x128xf32, #tpu.memory_space<vmem>>, vector<64x128xf32>
    %cst = arith.constant dense<0.000000e+00> : vector<64xf32>
    %1 = vector.multi_reduction <add>, %0, %cst [1] : vector<64x128xf32> to vector<64xf32>
    %2 = vector.shape_cast %1 : vector<64xf32> to vector<64x1xf32>
    %cst_1 = arith.constant 1.280000e+02 : f32
    %3 = vector.broadcast %cst_1 : f32 to vector<64x1xf32>
    %4 = arith.divf %2, %3 : vector<64x1xf32>
    %5 = vector.broadcast %4 : vector<64x1xf32> to vector<64x128xf32>
    %6 = arith.subf %0, %5 : vector<64x128xf32>
    %7 = arith.mulf %6, %6 : vector<64x128xf32>
    %cst_2 = arith.constant dense<0.000000e+00> : vector<64xf32>
    %8 = vector.multi_reduction <add>, %7, %cst_2 [1] : vector<64x128xf32> to vector<64xf32>
    %9 = vector.shape_cast %8 : vector<64xf32> to vector<64x1xf32>
    %cst_3 = arith.constant 1.280000e+02 : f32
    %10 = vector.broadcast %cst_3 : f32 to vector<64x1xf32>
    %11 = arith.divf %9, %10 : vector<64x1xf32>
    %12 = vector.broadcast %4 : vector<64x1xf32> to vector<64x128xf32>
    %13 = arith.subf %0, %12 : vector<64x128xf32>
    %cst_4 = arith.constant 9.99999974E-6 : f32
    %14 = vector.broadcast %cst_4 : f32 to vector<64x1xf32>
    %15 = arith.addf %11, %14 : vector<64x1xf32>
    %16 = math.rsqrt %15 : vector<64x1xf32>
    %17 = vector.broadcast %16 : vector<64x1xf32> to vector<64x128xf32>
    %18 = arith.mulf %13, %17 : vector<64x128xf32>
    %c0_5 = arith.constant 0 : index
    %c0_6 = arith.constant 0 : index
    %19 = vector.load %arg3[%c0_5, %c0_6] : memref<1x128xf32, #tpu.memory_space<vmem>>, vector<1x128xf32>
    %20 = vector.shape_cast %19 : vector<1x128xf32> to vector<128xf32>
    %21 = vector.shape_cast %20 : vector<128xf32> to vector<1x128xf32>
    %22 = vector.broadcast %21 : vector<1x128xf32> to vector<64x128xf32>
    %23 = arith.mulf %18, %22 : vector<64x128xf32>
    %c0_7 = arith.constant 0 : index
    %c0_8 = arith.constant 0 : index
    %24 = vector.load %arg4[%c0_7, %c0_8] : memref<1x128xf32, #tpu.memory_space<vmem>>, vector<1x128xf32>
    %25 = vector.shape_cast %24 : vector<1x128xf32> to vector<128xf32>
    %26 = vector.shape_cast %25 : vector<128xf32> to vector<1x128xf32>
    %27 = vector.broadcast %26 : vector<1x128xf32> to vector<64x128xf32>
    %28 = arith.addf %23, %27 : vector<64x128xf32>
    %c0_9 = arith.constant 0 : index
    %c0_10 = arith.constant 0 : index
    %29 = vector.load %arg5[%c0_9, %c0_10] : memref<128x256xf32, #tpu.memory_space<vmem>>, vector<128x256xf32>
    %cst_11 = arith.constant dense<0.000000e+00> : vector<64x256xf32>
    %30 = tpu.matmul %28, %29, %cst_11 {dimension_numbers = #tpu.dot_dimension_numbers<[1], [0], [0], [1], [0, 0, 1, 1], [], []>} : vector<64x128xf32>, vector<128x256xf32>, vector<64x256xf32> -> vector<64x256xf32>
    %c0_12 = arith.constant 0 : index
    %c0_13 = arith.constant 0 : index
    %31 = vector.load %arg6[%c0_12, %c0_13] : memref<1x256xf32, #tpu.memory_space<vmem>>, vector<1x256xf32>
    %32 = vector.shape_cast %31 : vector<1x256xf32> to vector<256xf32>
    %33 = vector.shape_cast %32 : vector<256xf32> to vector<1x256xf32>
    %34 = vector.broadcast %33 : vector<1x256xf32> to vector<64x256xf32>
    %35 = arith.addf %30, %34 : vector<64x256xf32>
    %c0_14 = arith.constant 0 : index
    %c0_15 = arith.constant 0 : index
    %36 = vector.load %arg7[%c0_14, %c0_15] : memref<64x256xf32, #tpu.memory_space<vmem>>, vector<64x256xf32>
    tpu.vector_store %arg7[%c0_14, %c0_15], %35 {strides = array<i32>} : memref<64x256xf32, #tpu.memory_space<vmem>>, vector<64x256xf32>,
    return
  }
  func.func @transform_0(%arg0: i32, %arg1: i32) -> (i32, i32) {
    %c0_i32 = arith.constant 0 : i32
    %c0_i32_0 = arith.constant 0 : i32
    return %arg0, %c0_i32 : i32, i32
  }
  func.func @transform_1(%arg0: i32, %arg1: i32) -> (i32, i32) {
    %c0_i32 = arith.constant 0 : i32
    %c0_i32_0 = arith.constant 0 : i32
    %c0_i32_1 = arith.constant 0 : i32
    return %c0_i32, %c0_i32_0 : i32, i32
  }
  func.func @transform_2(%arg0: i32, %arg1: i32) -> (i32, i32) {
    %c0_i32 = arith.constant 0 : i32
    %c0_i32_0 = arith.constant 0 : i32
    %c0_i32_1 = arith.constant 0 : i32
    return %c0_i32, %c0_i32_0 : i32, i32
  }
  func.func @transform_3(%arg0: i32, %arg1: i32) -> (i32, i32) {
    %c0_i32 = arith.constant 0 : i32
    %c0_i32_0 = arith.constant 0 : i32
    return %c0_i32, %arg1 : i32, i32
  }
  func.func @transform_4(%arg0: i32, %arg1: i32) -> (i32, i32) {
    %c0_i32 = arith.constant 0 : i32
    %c0_i32_0 = arith.constant 0 : i32
    return %c0_i32, %arg1 : i32, i32
  }
  func.func @transform_5(%arg0: i32, %arg1: i32) -> (i32, i32) {
    %c0_i32 = arith.constant 0 : i32
    return %arg0, %arg1 : i32, i32
  }
}

</mosaic_0001>

<llo_original>
// kernel: _lambda_.3
$region0: #{_lambda_.3}
  #allocation0 [shape = 'u32[]', space=smem, size = 0x4, offset = 0x4, fixed_abs, tag = 'smem constant byte address 0x4 - core index']
  #allocation1 [shape = 'u32[72,128]{1,0:T(1,128)}', space=vmem, size = 0x9000, scoped, tag = 'internal scratch']
  %s0 = inlined_call_operand.vmem [shape: f32[64,128], index: 0, kind: input, shape index: {}]
  %s1 = inlined_call_operand.vmem [shape: f32[1,128], index: 1, kind: input, shape index: {}]
  %s2 = inlined_call_operand.vmem [shape: f32[1,128], index: 2, kind: input, shape index: {}]
  %s3 = inlined_call_operand.vmem [shape: f32[128,256], index: 3, kind: input, shape index: {}]
  %s4 = inlined_call_operand.vmem [shape: f32[1,256], index: 4, kind: input, shape index: {}]
  %s5 = inlined_call_operand.vmem [shape: f32[64,256], index: 5, kind: output, shape index: {}]
  %s6 = sld [smem:[#allocation0]]
  $region30: #{_lambda_.3} parent=0
    _
  %s8 = ssub.s32 1, %s6
  %s9 = scalar_select 0, %s8, %s6
  // Predicated region
  $region2: #{_lambda_.3} parent=0 // pred_check
    _
  $region3: #{_lambda_.3} parent=0 // pred_check_branch
    %11 = sbr.rel (0) target = $region5
  $region4: #{_lambda_.3} parent=0 // pred_region
    _
  $region5: #{_lambda_.3} parent=0 // pred_fallthru
    _
  // Predicated region
  $region6: #{_lambda_.3} parent=0 // pred_check
    _
  $region7: #{_lambda_.3} parent=0 // pred_check_branch
    %13 = sbr.rel (0) target = $region9
  $region8: #{_lambda_.3} parent=0 // pred_region
    _
  $region9: #{_lambda_.3} parent=0 // pred_fallthru
    _
  // Predicated region
  $region10: #{_lambda_.3} parent=0 // pred_check
    _
  $region11: #{_lambda_.3} parent=0 // pred_check_branch
    %15 = sbr.rel (0) target = $region13
  $region12: #{_lambda_.3} parent=0 // pred_region
    _
  $region13: #{_lambda_.3} parent=0 // pred_fallthru
    _
  // Predicated region
  $region14: #{_lambda_.3} parent=0 // pred_check
    _
  $region15: #{_lambda_.3} parent=0 // pred_check_branch
    %17 = sbr.rel (0) target = $region17
  $region16: #{_lambda_.3} parent=0 // pred_region
    _
  $region17: #{_lambda_.3} parent=0 // pred_fallthru
    _
  // Predicated region
  $region18: #{_lambda_.3} parent=0 // pred_check
    _
  $region19: #{_lambda_.3} parent=0 // pred_check_branch
    %19 = sbr.rel (0) target = $region21
  $region20: #{_lambda_.3} parent=0 // pred_region
    _
  $region21: #{_lambda_.3} parent=0 // pred_fallthru
    _
  %v20 = vld [vmem:[%s0] sm:$0xff]
  %v21 = vld [vmem:[%s0 + $0x8] sm:$0xff]
  %v22 = vld [vmem:[%s0 + $0x10] sm:$0xff]
  %v23 = vld [vmem:[%s0 + $0x18] sm:$0xff]
  %v24 = vld [vmem:[%s0 + $0x20] sm:$0xff]
  %v25 = vld [vmem:[%s0 + $0x28] sm:$0xff]
  %v26 = vld [vmem:[%s0 + $0x30] sm:$0xff]
  %v27 = vld [vmem:[%s0 + $0x38] sm:$0xff]
  %28 = vadd.xlane.f32.xlu0 %v20
  %v29 = vpop.xlane.xlu0 %28
  %30 = vadd.xlane.f32.xlu0 %v21
  %v31 = vpop.xlane.xlu0 %30
  %32 = vadd.xlane.f32.xlu0 %v22
  %v33 = vpop.xlane.xlu0 %32
  %34 = vadd.xlane.f32.xlu0 %v23
  %v35 = vpop.xlane.xlu0 %34
  %36 = vadd.xlane.f32.xlu0 %v24
  %v37 = vpop.xlane.xlu0 %36
  %38 = vadd.xlane.f32.xlu0 %v25
  %v39 = vpop.xlane.xlu0 %38
  %40 = vadd.xlane.f32.xlu0 %v26
  %v41 = vpop.xlane.xlu0 %40
  %42 = vadd.xlane.f32.xlu0 %v27
  %v43 = vpop.xlane.xlu0 %42
  %v44 = vrcp.pop 128.0
  %v45 = vmul.f32 128.0, %v44
  %v46 = vsub.f32 1.0, %v45
  %v47 = vmul.f32 %v44, %v46
  %v48 = vadd.f32 %v44, %v47
  %vm49 = vweird.f32 %v44
  %v50 = vsel %vm49, %v44, %v48
  %v51 = vmul.f32 %v29, %v50
  %v52 = vmul.f32 %v31, %v50
  %v53 = vmul.f32 %v33, %v50
  %v54 = vmul.f32 %v35, %v50
  %v55 = vmul.f32 %v37, %v50
  %v56 = vmul.f32 %v39, %v50
  %v57 = vmul.f32 %v41, %v50
  %v58 = vmul.f32 %v43, %v50
  %v59 = vsub.f32 %v20, %v51
  %v60 = vsub.f32 %v21, %v52
  %v61 = vsub.f32 %v22, %v53
  %v62 = vsub.f32 %v23, %v54
  %v63 = vsub.f32 %v24, %v55
  %v64 = vsub.f32 %v25, %v56
  %v65 = vsub.f32 %v26, %v57
  %v66 = vsub.f32 %v27, %v58
  %v67 = vmul.f32 %v59, %v59
  %v68 = vmul.f32 %v60, %v60
  %v69 = vmul.f32 %v61, %v61
  %v70 = vmul.f32 %v62, %v62
  %v71 = vmul.f32 %v63, %v63
  %v72 = vmul.f32 %v64, %v64
  %v73 = vmul.f32 %v65, %v65
  %v74 = vmul.f32 %v66, %v66
  %75 = vadd.xlane.f32.xlu0 %v67
  %v76 = vpop.xlane.xlu0 %75
  %77 = vadd.xlane.f32.xlu0 %v68
  %v78 = vpop.xlane.xlu0 %77
  %79 = vadd.xlane.f32.xlu0 %v69
  %v80 = vpop.xlane.xlu0 %79
  %81 = vadd.xlane.f32.xlu0 %v70
  %v82 = vpop.xlane.xlu0 %81
  %83 = vadd.xlane.f32.xlu0 %v71
  %v84 = vpop.xlane.xlu0 %83
  %85 = vadd.xlane.f32.xlu0 %v72
  %v86 = vpop.xlane.xlu0 %85
  %87 = vadd.xlane.f32.xlu0 %v73
  %v88 = vpop.xlane.xlu0 %87
  %89 = vadd.xlane.f32.xlu0 %v74
  %v90 = vpop.xlane.xlu0 %89
  %v91 = vmul.f32 %v76, %v50
  %v92 = vmul.f32 %v78, %v50
  %v93 = vmul.f32 %v80, %v50
  %v94 = vmul.f32 %v82, %v50
  %v95 = vmul.f32 %v84, %v50
  %v96 = vmul.f32 %v86, %v50
  %v97 = vmul.f32 %v88, %v50
  %v98 = vmul.f32 %v90, %v50
  %v99 = vadd.f32 %v91, 1e-05
  %v100 = vadd.f32 %v92, 1e-05
  %v101 = vadd.f32 %v93, 1e-05
  %v102 = vadd.f32 %v94, 1e-05
  %v103 = vadd.f32 %v95, 1e-05
  %v104 = vadd.f32 %v96, 1e-05
  %v105 = vadd.f32 %v97, 1e-05
  %v106 = vadd.f32 %v98, 1e-05
  %v107 = vrsqrt.pop %v99
  %v108 = vmul.f32 %v107, %v99
  %v109 = vmul.f32 %v108, %v107
  %v110 = vmul.f32 0.5, %v109
  %v111 = vsub.f32 1.5, %v110
  %v112 = vmul.f32 %v107, %v111
  %vm113 = vweird.f32 %v99
  %vm114 = vweird.f32 %v107
  %vm115 = vmor %vm113, %vm114
  %v116 = vsel %vm115, %v107, %v112
  %v117 = vrsqrt.pop %v100
  %v118 = vmul.f32 %v117, %v100
  %v119 = vmul.f32 %v118, %v117
  %v120 = vmul.f32 0.5, %v119
  %v121 = vsub.f32 1.5, %v120
  %v122 = vmul.f32 %v117, %v121
  %vm123 = vweird.f32 %v100
  %vm124 = vweird.f32 %v117
  %vm125 = vmor %vm123, %vm124
  %v126 = vsel %vm125, %v117, %v122
  %v127 = vrsqrt.pop %v101
  %v128 = vmul.f32 %v127, %v101
  %v129 = vmul.f32 %v128, %v127
  %v130 = vmul.f32 0.5, %v129
  %v131 = vsub.f32 1.5, %v130
  %v132 = vmul.f32 %v127, %v131
  %vm133 = vweird.f32 %v101
  %vm134 = vweird.f32 %v127
  %vm135 = vmor %vm133, %vm134
  %v136 = vsel %vm135, %v127, %v132
  %v137 = vrsqrt.pop %v102
  %v138 = vmul.f32 %v137, %v102
  %v139 = vmul.f32 %v138, %v137
  %v140 = vmul.f32 0.5, %v139
  %v141 = vsub.f32 1.5, %v140
  %v142 = vmul.f32 %v137, %v141
  %vm143 = vweird.f32 %v102
  %vm144 = vweird.f32 %v137
  %vm145 = vmor %vm143, %vm144
  %v146 = vsel %vm145, %v137, %v142
  %v147 = vrsqrt.pop %v103
  %v148 = vmul.f32 %v147, %v103
  %v149 = vmul.f32 %v148, %v147
  %v150 = vmul.f32 0.5, %v149
  %v151 = vsub.f32 1.5, %v150
  %v152 = vmul.f32 %v147, %v151
  %vm153 = vweird.f32 %v103
  %vm154 = vweird.f32 %v147
  %vm155 = vmor %vm153, %vm154
  %v156 = vsel %vm155, %v147, %v152
  %v157 = vrsqrt.pop %v104
  %v158 = vmul.f32 %v157, %v104
  %v159 = vmul.f32 %v158, %v157
  %v160 = vmul.f32 0.5, %v159
  %v161 = vsub.f32 1.5, %v160
  %v162 = vmul.f32 %v157, %v161
  %vm163 = vweird.f32 %v104
  %vm164 = vweird.f32 %v157
  %vm165 = vmor %vm163, %vm164
  %v166 = vsel %vm165, %v157, %v162
  %v167 = vrsqrt.pop %v105
  %v168 = vmul.f32 %v167, %v105
  %v169 = vmul.f32 %v168, %v167
  %v170 = vmul.f32 0.5, %v169
  %v171 = vsub.f32 1.5, %v170
  %v172 = vmul.f32 %v167, %v171
  %vm173 = vweird.f32 %v105
  %vm174 = vweird.f32 %v167
  %vm175 = vmor %vm173, %vm174
  %v176 = vsel %vm175, %v167, %v172
  %v177 = vrsqrt.pop %v106
  %v178 = vmul.f32 %v177, %v106
  %v179 = vmul.f32 %v178, %v177
  %v180 = vmul.f32 0.5, %v179
  %v181 = vsub.f32 1.5, %v180
  %v182 = vmul.f32 %v177, %v181
  %vm183 = vweird.f32 %v106
  %vm184 = vweird.f32 %v177
  %vm185 = vmor %vm183, %vm184
  %v186 = vsel %vm185, %v177, %v182
  %v187 = vmul.f32 %v59, %v116
  %v188 = vmul.f32 %v60, %v126
  %v189 = vmul.f32 %v61, %v136
  %v190 = vmul.f32 %v62, %v146
  %v191 = vmul.f32 %v63, %v156
  %v192 = vmul.f32 %v64, %v166
  %v193 = vmul.f32 %v65, %v176
  %v194 = vmul.f32 %v66, %v186
  %v195 = vld [vmem:[%s1] sm:$0x1]
  %v197 = vperm.slane %v195, 0
  %v199 = vmul.f32 %v187, %v197
  %v200 = vmul.f32 %v188, %v197
  %v201 = vmul.f32 %v189, %v197
  %v202 = vmul.f32 %v190, %v197
  %v203 = vmul.f32 %v191, %v197
  %v204 = vmul.f32 %v192, %v197
  %v205 = vmul.f32 %v193, %v197
  %v206 = vmul.f32 %v194, %v197
  %v207 = vld [vmem:[%s2] sm:$0x1]
  %v209 = vperm.slane %v207, 0
  %v211 = vadd.f32 %v199, %v209
  %v212 = vadd.f32 %v200, %v209
  %v213 = vadd.f32 %v201, %v209
  %v214 = vadd.f32 %v202, %v209
  %v215 = vadd.f32 %v203, %v209
  %v216 = vadd.f32 %v204, %v209
  %v217 = vadd.f32 %v205, %v209
  %v218 = vadd.f32 %v206, %v209
  %v219 = vld [vmem:[%s3] sm:$0xff]
  %v220 = vld [vmem:[%s3 + $0x8] sm:$0xff]
  %v221 = vld [vmem:[%s3 + $0x10] sm:$0xff]
  %v222 = vld [vmem:[%s3 + $0x18] sm:$0xff]
  %v223 = vld [vmem:[%s3 + $0x20] sm:$0xff]
  %v224 = vld [vmem:[%s3 + $0x28] sm:$0xff]
  %v225 = vld [vmem:[%s3 + $0x30] sm:$0xff]
  %v226 = vld [vmem:[%s3 + $0x38] sm:$0xff]
  %v227 = vld [vmem:[%s3 + $0x40] sm:$0xff]
  %v228 = vld [vmem:[%s3 + $0x48] sm:$0xff]
  %v229 = vld [vmem:[%s3 + $0x50] sm:$0xff]
  %v230 = vld [vmem:[%s3 + $0x58] sm:$0xff]
  %v231 = vld [vmem:[%s3 + $0x60] sm:$0xff]
  %v232 = vld [vmem:[%s3 + $0x68] sm:$0xff]
  %v233 = vld [vmem:[%s3 + $0x70] sm:$0xff]
  %v234 = vld [vmem:[%s3 + $0x78] sm:$0xff]
  %v235 = vld [vmem:[%s3 + $0x80] sm:$0xff]
  %v236 = vld [vmem:[%s3 + $0x88] sm:$0xff]
  %v237 = vld [vmem:[%s3 + $0x90] sm:$0xff]
  %v238 = vld [vmem:[%s3 + $0x98] sm:$0xff]
  %v239 = vld [vmem:[%s3 + $0xa0] sm:$0xff]
  %v240 = vld [vmem:[%s3 + $0xa8] sm:$0xff]
  %v241 = vld [vmem:[%s3 + $0xb0] sm:$0xff]
  %v242 = vld [vmem:[%s3 + $0xb8] sm:$0xff]
  %v243 = vld [vmem:[%s3 + $0xc0] sm:$0xff]
  %v244 = vld [vmem:[%s3 + $0xc8] sm:$0xff]
  %v245 = vld [vmem:[%s3 + $0xd0] sm:$0xff]
  %v246 = vld [vmem:[%s3 + $0xd8] sm:$0xff]
  %v247 = vld [vmem:[%s3 + $0xe0] sm:$0xff]
  %v248 = vld [vmem:[%s3 + $0xe8] sm:$0xff]
  %v249 = vld [vmem:[%s3 + $0xf0] sm:$0xff]
  %v250 = vld [vmem:[%s3 + $0xf8] sm:$0xff]
  %v251 = vld [vmem:[%s4] sm:$0x3]
  %v253 = vperm.slane %v251, 0
  %v254 = vperm.slane %v251, 1
  %257 = vmatpush.msra.mxu0 %v249
  %258 = vmatpush.msra.mxu0 %v247
  %259 = vmatpush.msra.mxu0 %v245
  %260 = vmatpush.msra.mxu0 %v243
  %261 = vmatpush.msra.mxu0 %v241
  %262 = vmatpush.msra.mxu0 %v239
  %263 = vmatpush.msra.mxu0 %v237
  %264 = vmatpush.msra.mxu0 %v235
  %265 = vmatpush.msra.mxu0 %v233
  %266 = vmatpush.msra.mxu0 %v231
  %267 = vmatpush.msra.mxu0 %v229
  %268 = vmatpush.msra.mxu0 %v227
  %269 = vmatpush.msra.mxu0 %v225
  %270 = vmatpush.msra.mxu0 %v223
  %271 = vmatpush.msra.mxu0 %v221
  %272 = vmatpush.msra.mxu0 %v219
  %273 = vmatmul.f32.gmra.mxu0 %v211
  %v274 = vpop.f32.mrf.mxu0
  %v275 = vadd.f32 %v253, %v274
  %276 = vmatmul.f32.gmra.mxu0 %v212
  %v277 = vpop.f32.mrf.mxu0
  %v278 = vadd.f32 %v253, %v277
  %279 = vmatmul.f32.gmra.mxu0 %v213
  %v280 = vpop.f32.mrf.mxu0
  %v281 = vadd.f32 %v253, %v280
  %282 = vmatmul.f32.gmra.mxu0 %v214
  %v283 = vpop.f32.mrf.mxu0
  %v284 = vadd.f32 %v253, %v283
  %285 = vmatmul.f32.gmra.mxu0 %v215
  %v286 = vpop.f32.mrf.mxu0
  %v287 = vadd.f32 %v253, %v286
  %288 = vmatmul.f32.gmra.mxu0 %v216
  %v289 = vpop.f32.mrf.mxu0
  %v290 = vadd.f32 %v253, %v289
  %291 = vmatmul.f32.gmra.mxu0 %v217
  %v292 = vpop.f32.mrf.mxu0
  %v293 = vadd.f32 %v253, %v292
  %294 = vmatmul.f32.gmra.mxu0 %v218
  %v295 = vpop.f32.mrf.mxu0
  %v296 = vadd.f32 %v253, %v295
  %297 = vdwg.mxu0
  %298 = vmatpush.msra.mxu0 %v250
  %299 = vmatpush.msra.mxu0 %v248
  %300 = vmatpush.msra.mxu0 %v246
  %301 = vmatpush.msra.mxu0 %v244
  %302 = vmatpush.msra.mxu0 %v242
  %303 = vmatpush.msra.mxu0 %v240
  %304 = vmatpush.msra.mxu0 %v238
  %305 = vmatpush.msra.mxu0 %v236
  %306 = vmatpush.msra.mxu0 %v234
  %307 = vmatpush.msra.mxu0 %v232
  %308 = vmatpush.msra.mxu0 %v230
  %309 = vmatpush.msra.mxu0 %v228
  %310 = vmatpush.msra.mxu0 %v226
  %311 = vmatpush.msra.mxu0 %v224
  %312 = vmatpush.msra.mxu0 %v222
  %313 = vmatpush.msra.mxu0 %v220
  %314 = vmatmul.f32.gmra.mxu0 %v211
  %v315 = vpop.f32.mrf.mxu0
  %v316 = vadd.f32 %v254, %v315
  %317 = vmatmul.f32.gmra.mxu0 %v212
  %v318 = vpop.f32.mrf.mxu0
  %v319 = vadd.f32 %v254, %v318
  %320 = vmatmul.f32.gmra.mxu0 %v213
  %v321 = vpop.f32.mrf.mxu0
  %v322 = vadd.f32 %v254, %v321
  %323 = vmatmul.f32.gmra.mxu0 %v214
  %v324 = vpop.f32.mrf.mxu0
  %v325 = vadd.f32 %v254, %v324
  %326 = vmatmul.f32.gmra.mxu0 %v215
  %v327 = vpop.f32.mrf.mxu0
  %v328 = vadd.f32 %v254, %v327
  %329 = vmatmul.f32.gmra.mxu0 %v216
  %v330 = vpop.f32.mrf.mxu0
  %v331 = vadd.f32 %v254, %v330
  %332 = vmatmul.f32.gmra.mxu0 %v217
  %v333 = vpop.f32.mrf.mxu0
  %v334 = vadd.f32 %v254, %v333
  %335 = vmatmul.f32.gmra.mxu0 %v218
  %v336 = vpop.f32.mrf.mxu0
  %v337 = vadd.f32 %v254, %v336
  %338 = vdwg.mxu0
  %339 = vst [vmem:[%s5] sm:$0xff] %v275
  %340 = vst [vmem:[%s5 + $0x8] sm:$0xff] %v316
  %341 = vst [vmem:[%s5 + $0x10] sm:$0xff] %v278
  %342 = vst [vmem:[%s5 + $0x18] sm:$0xff] %v319
  %343 = vst [vmem:[%s5 + $0x20] sm:$0xff] %v281
  %344 = vst [vmem:[%s5 + $0x28] sm:$0xff] %v322
  %345 = vst [vmem:[%s5 + $0x30] sm:$0xff] %v284
  %346 = vst [vmem:[%s5 + $0x38] sm:$0xff] %v325
  %347 = vst [vmem:[%s5 + $0x40] sm:$0xff] %v287
  %348 = vst [vmem:[%s5 + $0x48] sm:$0xff] %v328
  %349 = vst [vmem:[%s5 + $0x50] sm:$0xff] %v290
  %350 = vst [vmem:[%s5 + $0x58] sm:$0xff] %v331
  %351 = vst [vmem:[%s5 + $0x60] sm:$0xff] %v293
  %352 = vst [vmem:[%s5 + $0x68] sm:$0xff] %v334
  %353 = vst [vmem:[%s5 + $0x70] sm:$0xff] %v296
  %354 = vst [vmem:[%s5 + $0x78] sm:$0xff] %v337
  // Predicated region
  $region22: #{_lambda_.3} parent=0 // pred_check
    _
  $region23: #{_lambda_.3} parent=0 // pred_check_branch
    %356 = sbr.rel (0) target = $region25
  $region24: #{_lambda_.3} parent=0 // pred_region
    _
  $region25: #{_lambda_.3} parent=0 // pred_fallthru
    _
  // Predicated region
  $region26: #{_lambda_.3} parent=0 // pred_check
    _
  $region27: #{_lambda_.3} parent=0 // pred_check_branch
    %358 = sbr.rel (0) target = $region29
  $region28: #{_lambda_.3} parent=0 // pred_region
    _
  $region29: #{_lambda_.3} parent=0 // pred_fallthru
    _

// kernel: _lambda_.2
$region0: #{_lambda_.2}
  #allocation0 [shape = 'u32[]', space=smem, size = 0x4, offset = 0x4, fixed_abs, tag = 'smem constant byte address 0x4 - core index']
  #allocation1 [shape = 'u32[72,128]{1,0:T(1,128)}', space=vmem, size = 0x9000, scoped, tag = 'internal scratch']
  #allocation2 [shape = 'f32[8,8,128]{2,1,0:T(8,128)}', space=vmem, size = 0x8000, scoped, tag = 'scratch operand']
  #allocation3 [shape = 'f32[8,8,128]{2,1,0:T(8,128)}', space=vmem, size = 0x8000, scoped, tag = 'scratch operand']
  #allocation4 [shape = 'f32[8,8,384]{2,1,0:T(8,128)}', space=vmem, size = 0x18000, scoped, tag = 'scratch operand']
  #allocation5 [shape = 'f32[8,128]{1,0:T(8,128)}', space=vmem, size = 0x1000, scoped, tag = 'scratch operand']
  %s0 = inlined_call_operand.vmem [shape: f32[8,8,128], index: 0, kind: input, shape index: {}]
  %s1 = inlined_call_operand.hbm [shape: f32[4,128,384], index: 1, kind: input, shape index: {}]
  %s2 = inlined_call_operand.hbm [shape: f32[4,128,384], index: 2, kind: input, shape index: {}]
  %s3 = inlined_call_operand.vmem [shape: f32[4,1,384], index: 3, kind: input, shape index: {}]
  %s4 = inlined_call_operand.vmem [shape: f32[4,1,128], index: 4, kind: input, shape index: {}]
  %s5 = inlined_call_operand.vmem [shape: f32[8,8,128], index: 5, kind: output, shape index: {}]
  %s6 = sld [smem:[#allocation0]]
  $region66: #{_lambda_.2} parent=0
    _
  %s8 = ssub.s32 1, %s6
  %s9 = scalar_select 0, %s8, %s6
  $region1: #{_lambda_.2} parent=0
    #allocation6 [shape = 'u8[786432]{0}', space=vmem, size = 0xc0000, scoped, tag = 'input window, operand 1, single buffered']
    #allocation7 [shape = 's32[1]{0}', space=sflag, size = 0x4, scoped, tag = 'scoped memory for _lambda_.2']
    #allocation8 [shape = 'u8[786432]{0}', space=vmem, size = 0xc0000, scoped, tag = 'input window, operand 2, single buffered']
    #allocation9 [shape = 's32[1]{0}', space=sflag, size = 0x4, scoped, tag = 'scoped memory for _lambda_.2']
    %10 = vsyncpa [#allocation7], 0
    %11 = vsyncpa [#allocation9], 0
    // Predicated region
    $region2: #{_lambda_.2} parent=1 // pred_check
      _
    $region3: #{_lambda_.2} parent=1 // pred_check_branch
      %13 = sbr.rel (0) target = $region5
    $region4: #{_lambda_.2} parent=1 // pred_region
      _
    $region5: #{_lambda_.2} parent=1 // pred_fallthru
      _
    // Predicated region
    $region6: #{_lambda_.2} parent=1 // pred_check
      _
    $region7: #{_lambda_.2} parent=1 // pred_check_branch
      %15 = sbr.rel (0) target = $region9
    $region8: #{_lambda_.2} parent=1 // pred_region
      %17 = vsyncadd [#allocation7], 0
      %s18 = sshll.u32 %s1, 4
      %s19 = int_to_ptr.hbm [resolvable:$true] %s18
      %s20 = sshll.u32 [#allocation6], 4
      %s21 = int_to_ptr.vmem [resolvable:$true] %s20
      %26 = dma.hbm_to_vmem [thread:$0]  %s19, 24576, %s21, [#allocation7], 384, 384, 24
    $region9: #{_lambda_.2} parent=1 // pred_fallthru
      _
    // Predicated region
    $region10: #{_lambda_.2} parent=1 // pred_check
      _
    $region11: #{_lambda_.2} parent=1 // pred_check_branch
      %28 = sbr.rel (0) target = $region13
    $region12: #{_lambda_.2} parent=1 // pred_region
      %30 = vsyncadd [#allocation9], 0
      %s31 = sshll.u32 %s2, 4
      %s32 = int_to_ptr.hbm [resolvable:$true] %s31
      %s33 = sshll.u32 [#allocation8], 4
      %s34 = int_to_ptr.vmem [resolvable:$true] %s33
      %39 = dma.hbm_to_vmem [thread:$0]  %s32, 24576, %s34, [#allocation9], 384, 384, 24
    $region13: #{_lambda_.2} parent=1 // pred_fallthru
      _
    // Predicated region
    $region14: #{_lambda_.2} parent=1 // pred_check
      _
    $region15: #{_lambda_.2} parent=1 // pred_check_branch
      %41 = sbr.rel (0) target = $region17
    $region16: #{_lambda_.2} parent=1 // pred_region
      _
    $region17: #{_lambda_.2} parent=1 // pred_fallthru
      _
    // Predicated region
    $region18: #{_lambda_.2} parent=1 // pred_check
      _
    $region19: #{_lambda_.2} parent=1 // pred_check_branch
      %43 = sbr.rel (0) target = $region21
    $region20: #{_lambda_.2} parent=1 // pred_region
      _
    $region21: #{_lambda_.2} parent=1 // pred_fallthru
      _
    // Predicated region
    $region22: #{_lambda_.2} parent=1 // pred_check
      _
    $region23: #{_lambda_.2} parent=1 // pred_check_branch
      %45 = sbr.rel (0) target = $region25
    $region24: #{_lambda_.2} parent=1 // pred_region
      %47 = dma.done [#allocation7], 24576
    $region25: #{_lambda_.2} parent=1 // pred_fallthru
      _
    // Predicated region
    $region26: #{_lambda_.2} parent=1 // pred_check
      _
    $region27: #{_lambda_.2} parent=1 // pred_check_branch
      %49 = sbr.rel (0) target = $region29
    $region28: #{_lambda_.2} parent=1 // pred_region
      %51 = dma.done [#allocation9], 24576
    $region29: #{_lambda_.2} parent=1 // pred_fallthru
      _
    %52 = vst [vmem:[#allocation5] sm:$0xff] 0.0
    %s53 = smul.u32 0, 8
    %s54 = scalar_lea.vmem %s0, %s53
    %v55 = vld [vmem:[%s54] sm:$0xff]
    %v56 = vld [vmem:[%s54 + $0x8] sm:$0xff]
    %v57 = vld [vmem:[%s54 + $0x10] sm:$0xff]
    %v58 = vld [vmem:[%s54 + $0x18] sm:$0xff]
    %v59 = vld [vmem:[%s54 + $0x20] sm:$0xff]
    %v60 = vld [vmem:[%s54 + $0x28] sm:$0xff]
    %v61 = vld [vmem:[%s54 + $0x30] sm:$0xff]
    %v62 = vld [vmem:[%s54 + $0x38] sm:$0xff]
    %v63 = vld [vmem:[#allocation6] sm:$0xff]
    %v64 = vld [vmem:[#allocation6 + $0x8] sm:$0xff]
    %v65 = vld [vmem:[#allocation6 + $0x10] sm:$0xff]
    %v66 = vld [vmem:[#allocation6 + $0x18] sm:$0xff]
    %v67 = vld [vmem:[#allocation6 + $0x20] sm:$0xff]
    %v68 = vld [vmem:[#allocation6 + $0x28] sm:$0xff]
    %v69 = vld [vmem:[#allocation6 + $0x30] sm:$0xff]
    %v70 = vld [vmem:[#allocation6 + $0x38] sm:$0xff]
    %v71 = vld [vmem:[#allocation6 + $0x40] sm:$0xff]
    %v72 = vld [vmem:[#allocation6 + $0x48] sm:$0xff]
    %v73 = vld [vmem:[#allocation6 + $0x50] sm:$0xff]
    %v74 = vld [vmem:[#allocation6 + $0x58] sm:$0xff]
    %v75 = vld [vmem:[#allocation6 + $0x60] sm:$0xff]
    %v76 = vld [vmem:[#allocation6 + $0x68] sm:$0xff]
    %v77 = vld [vmem:[#allocation6 + $0x70] sm:$0xff]
    %v78 = vld [vmem:[#allocation6 + $0x78] sm:$0xff]
    %v79 = vld [vmem:[#allocation6 + $0x80] sm:$0xff]
    %v80 = vld [vmem:[#allocation6 + $0x88] sm:$0xff]
    %v81 = vld [vmem:[#allocation6 + $0x90] sm:$0xff]
    %v82 = vld [vmem:[#allocation6 + $0x98] sm:$0xff]
    %v83 = vld [vmem:[#allocation6 + $0xa0] sm:$0xff]
    %v84 = vld [vmem:[#allocation6 + $0xa8] sm:$0xff]
    %v85 = vld [vmem:[#allocation6 + $0xb0] sm:$0xff]
    %v86 = vld [vmem:[#allocation6 + $0xb8] sm:$0xff]
    %v87 = vld [vmem:[#allocation6 + $0xc0] sm:$0xff]
    %v88 = vld [vmem:[#allocation6 + $0xc8] sm:$0xff]
    %v89 = vld [vmem:[#allocation6 + $0xd0] sm:$0xff]
    %v90 = vld [vmem:[#allocation6 + $0xd8] sm:$0xff]
    %v91 = vld [vmem:[#allocation6 + $0xe0] sm:$0xff]
    %v92 = vld [vmem:[#allocation6 + $0xe8] sm:$0xff]
    %v93 = vld [vmem:[#allocation6 + $0xf0] sm:$0xff]
    %v94 = vld [vmem:[#allocation6 + $0xf8] sm:$0xff]
    %v95 = vld [vmem:[#allocation6 + $0x100] sm:$0xff]
    %v96 = vld [vmem:[#allocation6 + $0x108] sm:$0xff]
    %v97 = vld [vmem:[#allocation6 + $0x110] sm:$0xff]
    %v98 = vld [vmem:[#allocation6 + $0x118] sm:$0xff]
    %v99 = vld [vmem:[#allocation6 + $0x120] sm:$0xff]
    %v100 = vld [vmem:[#allocation6 + $0x128] sm:$0xff]
    %v101 = vld [vmem:[#allocation6 + $0x130] sm:$0xff]
    %v102 = vld [vmem:[#allocation6 + $0x138] sm:$0xff]
    %v103 = vld [vmem:[#allocation6 + $0x140] sm:$0xff]
    %v104 = vld [vmem:[#allocation6 + $0x148] sm:$0xff]
    %v105 = vld [vmem:[#allocation6 + $0x150] sm:$0xff]
    %v106 = vld [vmem:[#allocation6 + $0x158] sm:$0xff]
    %v107 = vld [vmem:[#allocation6 + $0x160] sm:$0xff]
    %v108 = vld [vmem:[#allocation6 + $0x168] sm:$0xff]
    %v109 = vld [vmem:[#allocation6 + $0x170] sm:$0xff]
    %v110 = vld [vmem:[#allocation6 + $0x178] sm:$0xff]
    %v111 = vld [vmem:[%s3] sm:$0x7]
    %v113 = vperm.slane %v111, 0
    %v114 = vperm.slane %v111, 1
    %v115 = vperm.slane %v111, 2
    %119 = vmatpush.msra.mxu0 %v108
    %120 = vmatpush.msra.mxu0 %v105
    %121 = vmatpush.msra.mxu0 %v102
    %122 = vmatpush.msra.mxu0 %v99
    %123 = vmatpush.msra.mxu0 %v96
    %124 = vmatpush.msra.mxu0 %v93
    %125 = vmatpush.msra.mxu0 %v90
    %126 = vmatpush.msra.mxu0 %v87
    %127 = vmatpush.msra.mxu0 %v84
    %128 = vmatpush.msra.mxu0 %v81
    %129 = vmatpush.msra.mxu0 %v78
    %130 = vmatpush.msra.mxu0 %v75
    %131 = vmatpush.msra.mxu0 %v72
    %132 = vmatpush.msra.mxu0 %v69
    %133 = vmatpush.msra.mxu0 %v66
    %134 = vmatpush.msra.mxu0 %v63
    %135 = vmatmul.f32.gmra.mxu0 %v55
    %v136 = vpop.f32.mrf.mxu0
    %v137 = vadd.f32 %v113, %v136
    %138 = vmatmul.f32.gmra.mxu0 %v56
    %v139 = vpop.f32.mrf.mxu0
    %v140 = vadd.f32 %v113, %v139
    %141 = vmatmul.f32.gmra.mxu0 %v57
    %v142 = vpop.f32.mrf.mxu0
    %v143 = vadd.f32 %v113, %v142
    %144 = vmatmul.f32.gmra.mxu0 %v58
    %v145 = vpop.f32.mrf.mxu0
    %v146 = vadd.f32 %v113, %v145
    %147 = vmatmul.f32.gmra.mxu0 %v59
    %v148 = vpop.f32.mrf.mxu0
    %v149 = vadd.f32 %v113, %v148
    %150 = vmatmul.f32.gmra.mxu0 %v60
    %v151 = vpop.f32.mrf.mxu0
    %v152 = vadd.f32 %v113, %v151
    %153 = vmatmul.f32.gmra.mxu0 %v61
    %v154 = vpop.f32.mrf.mxu0
    %v155 = vadd.f32 %v113, %v154
    %156 = vmatmul.f32.gmra.mxu0 %v62
    %v157 = vpop.f32.mrf.mxu0
    %v158 = vadd.f32 %v113, %v157
    %159 = vdwg.mxu0
    %160 = vmatpush.msra.mxu0 %v109
    %161 = vmatpush.msra.mxu0 %v106
    %162 = vmatpush.msra.mxu0 %v103
    %163 = vmatpush.msra.mxu0 %v100
    %164 = vmatpush.msra.mxu0 %v97
    %165 = vmatpush.msra.mxu0 %v94
    %166 = vmatpush.msra.mxu0 %v91
    %167 = vmatpush.msra.mxu0 %v88
    %168 = vmatpush.msra.mxu0 %v85
    %169 = vmatpush.msra.mxu0 %v82
    %170 = vmatpush.msra.mxu0 %v79
    %171 = vmatpush.msra.mxu0 %v76
    %172 = vmatpush.msra.mxu0 %v73
    %173 = vmatpush.msra.mxu0 %v70
    %174 = vmatpush.msra.mxu0 %v67
    %175 = vmatpush.msra.mxu0 %v64
    %176 = vmatmul.f32.gmra.mxu0 %v55
    %v177 = vpop.f32.mrf.mxu0
    %v178 = vadd.f32 %v114, %v177
    %179 = vmatmul.f32.gmra.mxu0 %v56
    %v180 = vpop.f32.mrf.mxu0
    %v181 = vadd.f32 %v114, %v180
    %182 = vmatmul.f32.gmra.mxu0 %v57
    %v183 = vpop.f32.mrf.mxu0
    %v184 = vadd.f32 %v114, %v183
    %185 = vmatmul.f32.gmra.mxu0 %v58
    %v186 = vpop.f32.mrf.mxu0
    %v187 = vadd.f32 %v114, %v186
    %188 = vmatmul.f32.gmra.mxu0 %v59
    %v189 = vpop.f32.mrf.mxu0
    %v190 = vadd.f32 %v114, %v189
    %191 = vmatmul.f32.gmra.mxu0 %v60
    %v192 = vpop.f32.mrf.mxu0
    %v193 = vadd.f32 %v114, %v192
    %194 = vmatmul.f32.gmra.mxu0 %v61
    %v195 = vpop.f32.mrf.mxu0
    %v196 = vadd.f32 %v114, %v195
    %197 = vmatmul.f32.gmra.mxu0 %v62
    %v198 = vpop.f32.mrf.mxu0
    %v199 = vadd.f32 %v114, %v198
    %200 = vdwg.mxu0
    %201 = vmatpush.msra.mxu0 %v110
    %202 = vmatpush.msra.mxu0 %v107
    %203 = vmatpush.msra.mxu0 %v104
    %204 = vmatpush.msra.mxu0 %v101
    %205 = vmatpush.msra.mxu0 %v98
    %206 = vmatpush.msra.mxu0 %v95
    %207 = vmatpush.msra.mxu0 %v92
    %208 = vmatpush.msra.mxu0 %v89
    %209 = vmatpush.msra.mxu0 %v86
    %210 = vmatpush.msra.mxu0 %v83
    %211 = vmatpush.msra.mxu0 %v80
    %212 = vmatpush.msra.mxu0 %v77
    %213 = vmatpush.msra.mxu0 %v74
    %214 = vmatpush.msra.mxu0 %v71
    %215 = vmatpush.msra.mxu0 %v68
    %216 = vmatpush.msra.mxu0 %v65
    %217 = vmatmul.f32.gmra.mxu0 %v55
    %v218 = vpop.f32.mrf.mxu0
    %v219 = vadd.f32 %v115, %v218
    %220 = vmatmul.f32.gmra.mxu0 %v56
    %v221 = vpop.f32.mrf.mxu0
    %v222 = vadd.f32 %v115, %v221
    %223 = vmatmul.f32.gmra.mxu0 %v57
    %v224 = vpop.f32.mrf.mxu0
    %v225 = vadd.f32 %v115, %v224
    %226 = vmatmul.f32.gmra.mxu0 %v58
    %v227 = vpop.f32.mrf.mxu0
    %v228 = vadd.f32 %v115, %v227
    %229 = vmatmul.f32.gmra.mxu0 %v59
    %v230 = vpop.f32.mrf.mxu0
    %v231 = vadd.f32 %v115, %v230
    %232 = vmatmul.f32.gmra.mxu0 %v60
    %v233 = vpop.f32.mrf.mxu0
    %v234 = vadd.f32 %v115, %v233
    %235 = vmatmul.f32.gmra.mxu0 %v61
    %v236 = vpop.f32.mrf.mxu0
    %v237 = vadd.f32 %v115, %v236
    %238 = vmatmul.f32.gmra.mxu0 %v62
    %v239 = vpop.f32.mrf.mxu0
    %v240 = vadd.f32 %v115, %v239
    %241 = vdwg.mxu0
    %242 = vst [vmem:[#allocation4] sm:$0xff] %v137
    %243 = vst [vmem:[#allocation4 + $0x8] sm:$0xff] %v178
    %244 = vst [vmem:[#allocation4 + $0x10] sm:$0xff] %v219
    %245 = vst [vmem:[#allocation4 + $0x18] sm:$0xff] %v140
    %246 = vst [vmem:[#allocation4 + $0x20] sm:$0xff] %v181
    %247 = vst [vmem:[#allocation4 + $0x28] sm:$0xff] %v222
    %248 = vst [vmem:[#allocation4 + $0x30] sm:$0xff] %v143
    %249 = vst [vmem:[#allocation4 + $0x38] sm:$0xff] %v184
    %250 = vst [vmem:[#allocation4 + $0x40] sm:$0xff] %v225
    %251 = vst [vmem:[#allocation4 + $0x48] sm:$0xff] %v146
    %252 = vst [vmem:[#allocation4 + $0x50] sm:$0xff] %v187
    %253 = vst [vmem:[#allocation4 + $0x58] sm:$0xff] %v228
    %254 = vst [vmem:[#allocation4 + $0x60] sm:$0xff] %v149
    %255 = vst [vmem:[#allocation4 + $0x68] sm:$0xff] %v190
    %256 = vst [vmem:[#allocation4 + $0x70] sm:$0xff] %v231
    %257 = vst [vmem:[#allocation4 + $0x78] sm:$0xff] %v152
    %258 = vst [vmem:[#allocation4 + $0x80] sm:$0xff] %v193
    %259 = vst [vmem:[#allocation4 + $0x88] sm:$0xff] %v234
    %260 = vst [vmem:[#allocation4 + $0x90] sm:$0xff] %v155
    %261 = vst [vmem:[#allocation4 + $0x98] sm:$0xff] %v196
    %262 = vst [vmem:[#allocation4 + $0xa0] sm:$0xff] %v237
    %263 = vst [vmem:[#allocation4 + $0xa8] sm:$0xff] %v158
    %264 = vst [vmem:[#allocation4 + $0xb0] sm:$0xff] %v199
    %265 = vst [vmem:[#allocation4 + $0xb8] sm:$0xff] %v240
    loop: start=0, step=1, limit=8
    $region30: #{_lambda_.2} parent=1 // loop_pre_header
      _
    $region31: #{_lambda_.2} parent=1 // loop_header
      %s267 = sphi 0, %s271
      %p268 = scmp.ge.s32.totalorder %s267, 8
    $region32: #{_lambda_.2} parent=1 // loop_header_branch
      %270 = sbr.rel (%p268) target = $region36
    $region33: #{_lambda_.2} parent=1 // loop_body
      %v272 = vld [vmem:[#allocation5] sm:$0xff]
      %s273 = smul.u32 %s267, 3
      %s274 = smul.addr %s273, 8
      %s275 = scalar_lea.vmem [#allocation4], %s274
      %v276 = vld [vmem:[%s275] sm:$0xff]
      %v277 = vld [vmem:[%s275 + $0x8] sm:$0xff]
      %v278 = vld [vmem:[%s275 + $0x10] sm:$0xff]
      %v279 = vld [vmem:[#allocation8] sm:$0xff]
      %v280 = vld [vmem:[#allocation8 + $0x8] sm:$0xff]
      %v281 = vld [vmem:[#allocation8 + $0x10] sm:$0xff]
      %v282 = vld [vmem:[#allocation8 + $0x18] sm:$0xff]
      %v283 = vld [vmem:[#allocation8 + $0x20] sm:$0xff]
      %v284 = vld [vmem:[#allocation8 + $0x28] sm:$0xff]
      %v285 = vld [vmem:[#allocation8 + $0x30] sm:$0xff]
      %v286 = vld [vmem:[#allocation8 + $0x38] sm:$0xff]
      %v287 = vld [vmem:[#allocation8 + $0x40] sm:$0xff]
      %v288 = vld [vmem:[#allocation8 + $0x48] sm:$0xff]
      %v289 = vld [vmem:[#allocation8 + $0x50] sm:$0xff]
      %v290 = vld [vmem:[#allocation8 + $0x58] sm:$0xff]
      %v291 = vld [vmem:[#allocation8 + $0x60] sm:$0xff]
      %v292 = vld [vmem:[#allocation8 + $0x68] sm:$0xff]
      %v293 = vld [vmem:[#allocation8 + $0x70] sm:$0xff]
      %v294 = vld [vmem:[#allocation8 + $0x78] sm:$0xff]
      %v295 = vld [vmem:[#allocation8 + $0x80] sm:$0xff]
      %v296 = vld [vmem:[#allocation8 + $0x88] sm:$0xff]
      %v297 = vld [vmem:[#allocation8 + $0x90] sm:$0xff]
      %v298 = vld [vmem:[#allocation8 + $0x98] sm:$0xff]
      %v299 = vld [vmem:[#allocation8 + $0xa0] sm:$0xff]
      %v300 = vld [vmem:[#allocation8 + $0xa8] sm:$0xff]
      %v301 = vld [vmem:[#allocation8 + $0xb0] sm:$0xff]
      %v302 = vld [vmem:[#allocation8 + $0xb8] sm:$0xff]
      %v303 = vld [vmem:[#allocation8 + $0xc0] sm:$0xff]
      %v304 = vld [vmem:[#allocation8 + $0xc8] sm:$0xff]
      %v305 = vld [vmem:[#allocation8 + $0xd0] sm:$0xff]
      %v306 = vld [vmem:[#allocation8 + $0xd8] sm:$0xff]
      %v307 = vld [vmem:[#allocation8 + $0xe0] sm:$0xff]
      %v308 = vld [vmem:[#allocation8 + $0xe8] sm:$0xff]
      %v309 = vld [vmem:[#allocation8 + $0xf0] sm:$0xff]
      %v310 = vld [vmem:[#allocation8 + $0xf8] sm:$0xff]
      %v311 = vld [vmem:[#allocation8 + $0x100] sm:$0xff]
      %v312 = vld [vmem:[#allocation8 + $0x108] sm:$0xff]
      %v313 = vld [vmem:[#allocation8 + $0x110] sm:$0xff]
      %v314 = vld [vmem:[#allocation8 + $0x118] sm:$0xff]
      %v315 = vld [vmem:[#allocation8 + $0x120] sm:$0xff]
      %v316 = vld [vmem:[#allocation8 + $0x128] sm:$0xff]
      %v317 = vld [vmem:[#allocation8 + $0x130] sm:$0xff]
      %v318 = vld [vmem:[#allocation8 + $0x138] sm:$0xff]
      %v319 = vld [vmem:[#allocation8 + $0x140] sm:$0xff]
      %v320 = vld [vmem:[#allocation8 + $0x148] sm:$0xff]
      %v321 = vld [vmem:[#allocation8 + $0x150] sm:$0xff]
      %v322 = vld [vmem:[#allocation8 + $0x158] sm:$0xff]
      %v323 = vld [vmem:[#allocation8 + $0x160] sm:$0xff]
      %v324 = vld [vmem:[#allocation8 + $0x168] sm:$0xff]
      %v325 = vld [vmem:[#allocation8 + $0x170] sm:$0xff]
      %v326 = vld [vmem:[#allocation8 + $0x178] sm:$0xff]
      %327 = vmatpush.msra.mxu0 %v324
      %328 = vmatpush.msra.mxu0 %v321
      %329 = vmatpush.msra.mxu0 %v318
      %330 = vmatpush.msra.mxu0 %v315
      %331 = vmatpush.msra.mxu0 %v312
      %332 = vmatpush.msra.mxu0 %v309
      %333 = vmatpush.msra.mxu0 %v306
      %334 = vmatpush.msra.mxu0 %v303
      %335 = vmatpush.msra.mxu0 %v300
      %336 = vmatpush.msra.mxu0 %v297
      %337 = vmatpush.msra.mxu0 %v294
      %338 = vmatpush.msra.mxu0 %v291
      %339 = vmatpush.msra.mxu0 %v288
      %340 = vmatpush.msra.mxu0 %v285
      %341 = vmatpush.msra.mxu0 %v282
      %342 = vmatpush.msra.mxu0 %v279
      %343 = vmatmul.f32.gmra.mxu0 %v272
      %v344 = vpop.f32.mrf.mxu0
      %v345 = vadd.f32 0.0, %v344
      %346 = vdwg.mxu0
      %347 = vmatpush.msra.mxu0 %v325
      %348 = vmatpush.msra.mxu0 %v322
      %349 = vmatpush.msra.mxu0 %v319
      %350 = vmatpush.msra.mxu0 %v316
      %351 = vmatpush.msra.mxu0 %v313
      %352 = vmatpush.msra.mxu0 %v310
      %353 = vmatpush.msra.mxu0 %v307
      %354 = vmatpush.msra.mxu0 %v304
      %355 = vmatpush.msra.mxu0 %v301
      %356 = vmatpush.msra.mxu0 %v298
      %357 = vmatpush.msra.mxu0 %v295
      %358 = vmatpush.msra.mxu0 %v292
      %359 = vmatpush.msra.mxu0 %v289
      %360 = vmatpush.msra.mxu0 %v286
      %361 = vmatpush.msra.mxu0 %v283
      %362 = vmatpush.msra.mxu0 %v280
      %363 = vmatmul.f32.gmra.mxu0 %v272
      %v364 = vpop.f32.mrf.mxu0
      %v365 = vadd.f32 0.0, %v364
      %366 = vdwg.mxu0
      %367 = vmatpush.msra.mxu0 %v326
      %368 = vmatpush.msra.mxu0 %v323
      %369 = vmatpush.msra.mxu0 %v320
      %370 = vmatpush.msra.mxu0 %v317
      %371 = vmatpush.msra.mxu0 %v314
      %372 = vmatpush.msra.mxu0 %v311
      %373 = vmatpush.msra.mxu0 %v308
      %374 = vmatpush.msra.mxu0 %v305
      %375 = vmatpush.msra.mxu0 %v302
      %376 = vmatpush.msra.mxu0 %v299
      %377 = vmatpush.msra.mxu0 %v296
      %378 = vmatpush.msra.mxu0 %v293
      %379 = vmatpush.msra.mxu0 %v290
      %380 = vmatpush.msra.mxu0 %v287
      %381 = vmatpush.msra.mxu0 %v284
      %382 = vmatpush.msra.mxu0 %v281
      %383 = vmatmul.f32.gmra.mxu0 %v272
      %v384 = vpop.f32.mrf.mxu0
      %v385 = vadd.f32 0.0, %v384
      %386 = vdwg.mxu0
      %v387 = vadd.f32 %v276, %v345
      %v388 = vxor.u32 %v387, 2147483648
      %v389 = vmul.f32 %v388, 1.442695
      %v390 = vpow.pop %v389
      %v391 = vadd.f32 %v390, 1.0
      %v392 = vrcp.pop %v391
      %v393 = vmul.f32 %v391, %v392
      %v394 = vsub.f32 1.0, %v393
      %v395 = vmul.f32 %v392, %v394
      %v396 = vadd.f32 %v392, %v395
      %vm397 = vweird.f32 %v391
      %vm398 = vweird.f32 %v392
      %vm399 = vmor %vm397, %vm398
      %v400 = vsel %vm399, %v392, %v396
      %v401 = vand.u32 2147483647, %v391
      %vm402 = vcmp.eq.f32.partialorder %v401, 8.507059e+37
      %v403 = vand.u32 %v391, 2147483648
      %v404 = vor.u32 1.1754944e-38, %v403
      %v405 = vsel %vm402, %v404, %v400
      %v406 = vmul.f32 1.0, %v405
      %v407 = vadd.f32 %v277, %v365
      %v408 = vxor.u32 %v407, 2147483648
      %v409 = vmul.f32 %v408, 1.442695
      %v410 = vpow.pop %v409
      %v411 = vadd.f32 %v410, 1.0
      %v412 = vrcp.pop %v411
      %v413 = vmul.f32 %v411, %v412
      %v414 = vsub.f32 1.0, %v413
      %v415 = vmul.f32 %v412, %v414
      %v416 = vadd.f32 %v412, %v415
      %vm417 = vweird.f32 %v411
      %vm418 = vweird.f32 %v412
      %vm419 = vmor %vm417, %vm418
      %v420 = vsel %vm419, %v412, %v416
      %v421 = vand.u32 2147483647, %v411
      %vm422 = vcmp.eq.f32.partialorder %v421, 8.507059e+37
      %v423 = vand.u32 %v411, 2147483648
      %v424 = vor.u32 1.1754944e-38, %v423
      %v425 = vsel %vm422, %v424, %v420
      %v426 = vmul.f32 1.0, %v425
      %v427 = vld [vmem:[%s4] sm:$0x1]
      %v429 = vperm.slane %v427, 0
      %v431 = vadd.f32 %v385, %v429
      %v432 = vmul.f32 %v406, %v431
      %v433 = vadd.f32 %v278, %v432
      %v434 = vtanh.pop %v433
      %v435 = vsub.f32 1.0, %v426
      %v436 = vmul.f32 %v435, %v434
      %v437 = vmul.f32 %v426, %v272
      %v438 = vadd.f32 %v436, %v437
      %439 = vst [vmem:[#allocation5] sm:$0xff] %v438
      %s440 = sadd.s32 0, %s267
      %s441 = smul.u32 %s440, 8
      %s442 = scalar_lea.vmem [#allocation2], %s441
      %443 = vst [vmem:[%s442] sm:$0xff] %v438
    $region34: #{_lambda_.2} parent=1 // loop_footer
      %s271 = sadd.s32 1, %s267
    $region35: #{_lambda_.2} parent=1 // loop_footer_branch
      %266 = sbr.rel target = $region31
    $region36: #{_lambda_.2} parent=1 // loop_exit
      _
    %444 = vst [vmem:[#allocation5] sm:$0xff] 0.0
    %s445 = scalar_lea.vmem [#allocation2], %s53
    %v446 = vld [vmem:[%s445] sm:$0xff]
    %v447 = vld [vmem:[%s445 + $0x8] sm:$0xff]
    %v448 = vld [vmem:[%s445 + $0x10] sm:$0xff]
    %v449 = vld [vmem:[%s445 + $0x18] sm:$0xff]
    %v450 = vld [vmem:[%s445 + $0x20] sm:$0xff]
    %v451 = vld [vmem:[%s445 + $0x28] sm:$0xff]
    %v452 = vld [vmem:[%s445 + $0x30] sm:$0xff]
    %v453 = vld [vmem:[%s445 + $0x38] sm:$0xff]
    %s454 = scalar_lea.vmem [#allocation6], 384
    %v455 = vld [vmem:[%s454] sm:$0xff]
    %v456 = vld [vmem:[%s454 + $0x8] sm:$0xff]
    %v457 = vld [vmem:[%s454 + $0x10] sm:$0xff]
    %v458 = vld [vmem:[%s454 + $0x18] sm:$0xff]
    %v459 = vld [vmem:[%s454 + $0x20] sm:$0xff]
    %v460 = vld [vmem:[%s454 + $0x28] sm:$0xff]
    %v461 = vld [vmem:[%s454 + $0x30] sm:$0xff]
    %v462 = vld [vmem:[%s454 + $0x38] sm:$0xff]
    %v463 = vld [vmem:[%s454 + $0x40] sm:$0xff]
    %v464 = vld [vmem:[%s454 + $0x48] sm:$0xff]
    %v465 = vld [vmem:[%s454 + $0x50] sm:$0xff]
    %v466 = vld [vmem:[%s454 + $0x58] sm:$0xff]
    %v467 = vld [vmem:[%s454 + $0x60] sm:$0xff]
    %v468 = vld [vmem:[%s454 + $0x68] sm:$0xff]
    %v469 = vld [vmem:[%s454 + $0x70] sm:$0xff]
    %v470 = vld [vmem:[%s454 + $0x78] sm:$0xff]
    %v471 = vld [vmem:[%s454 + $0x80] sm:$0xff]
    %v472 = vld [vmem:[%s454 + $0x88] sm:$0xff]
    %v473 = vld [vmem:[%s454 + $0x90] sm:$0xff]
    %v474 = vld [vmem:[%s454 + $0x98] sm:$0xff]
    %v475 = vld [vmem:[%s454 + $0xa0] sm:$0xff]
    %v476 = vld [vmem:[%s454 + $0xa8] sm:$0xff]
    %v477 = vld [vmem:[%s454 + $0xb0] sm:$0xff]
    %v478 = vld [vmem:[%s454 + $0xb8] sm:$0xff]
    %v479 = vld [vmem:[%s454 + $0xc0] sm:$0xff]
    %v480 = vld [vmem:[%s454 + $0xc8] sm:$0xff]
    %v481 = vld [vmem:[%s454 + $0xd0] sm:$0xff]
    %v482 = vld [vmem:[%s454 + $0xd8] sm:$0xff]
    %v483 = vld [vmem:[%s454 + $0xe0] sm:$0xff]
    %v484 = vld [vmem:[%s454 + $0xe8] sm:$0xff]
    %v485 = vld [vmem:[%s454 + $0xf0] sm:$0xff]
    %v486 = vld [vmem:[%s454 + $0xf8] sm:$0xff]
    %v487 = vld [vmem:[%s454 + $0x100] sm:$0xff]
    %v488 = vld [vmem:[%s454 + $0x108] sm:$0xff]
    %v489 = vld [vmem:[%s454 + $0x110] sm:$0xff]
    %v490 = vld [vmem:[%s454 + $0x118] sm:$0xff]
    %v491 = vld [vmem:[%s454 + $0x120] sm:$0xff]
    %v492 = vld [vmem:[%s454 + $0x128] sm:$0xff]
    %v493 = vld [vmem:[%s454 + $0x130] sm:$0xff]
    %v494 = vld [vmem:[%s454 + $0x138] sm:$0xff]
    %v495 = vld [vmem:[%s454 + $0x140] sm:$0xff]
    %v496 = vld [vmem:[%s454 + $0x148] sm:$0xff]
    %v497 = vld [vmem:[%s454 + $0x150] sm:$0xff]
    %v498 = vld [vmem:[%s454 + $0x158] sm:$0xff]
    %v499 = vld [vmem:[%s454 + $0x160] sm:$0xff]
    %v500 = vld [vmem:[%s454 + $0x168] sm:$0xff]
    %v501 = vld [vmem:[%s454 + $0x170] sm:$0xff]
    %v502 = vld [vmem:[%s454 + $0x178] sm:$0xff]
    %s503 = scalar_lea.vmem %s3, 3
    %v504 = vld [vmem:[%s503] sm:$0x7]
    %v506 = vperm.slane %v504, 0
    %v507 = vperm.slane %v504, 1
    %v508 = vperm.slane %v504, 2
    %512 = vmatpush.msra.mxu0 %v500
    %513 = vmatpush.msra.mxu0 %v497
    %514 = vmatpush.msra.mxu0 %v494
    %515 = vmatpush.msra.mxu0 %v491
    %516 = vmatpush.msra.mxu0 %v488
    %517 = vmatpush.msra.mxu0 %v485
    %518 = vmatpush.msra.mxu0 %v482
    %519 = vmatpush.msra.mxu0 %v479
    %520 = vmatpush.msra.mxu0 %v476
    %521 = vmatpush.msra.mxu0 %v473
    %522 = vmatpush.msra.mxu0 %v470
    %523 = vmatpush.msra.mxu0 %v467
    %524 = vmatpush.msra.mxu0 %v464
    %525 = vmatpush.msra.mxu0 %v461
    %526 = vmatpush.msra.mxu0 %v458
    %527 = vmatpush.msra.mxu0 %v455
    %528 = vmatmul.f32.gmra.mxu0 %v446
    %v529 = vpop.f32.mrf.mxu0
    %v530 = vadd.f32 %v506, %v529
    %531 = vmatmul.f32.gmra.mxu0 %v447
    %v532 = vpop.f32.mrf.mxu0
    %v533 = vadd.f32 %v506, %v532
    %534 = vmatmul.f32.gmra.mxu0 %v448
    %v535 = vpop.f32.mrf.mxu0
    %v536 = vadd.f32 %v506, %v535
    %537 = vmatmul.f32.gmra.mxu0 %v449
    %v538 = vpop.f32.mrf.mxu0
    %v539 = vadd.f32 %v506, %v538
    %540 = vmatmul.f32.gmra.mxu0 %v450
    %v541 = vpop.f32.mrf.mxu0
    %v542 = vadd.f32 %v506, %v541
    %543 = vmatmul.f32.gmra.mxu0 %v451
    %v544 = vpop.f32.mrf.mxu0
    %v545 = vadd.f32 %v506, %v544
    %546 = vmatmul.f32.gmra.mxu0 %v452
    %v547 = vpop.f32.mrf.mxu0
    %v548 = vadd.f32 %v506, %v547
    %549 = vmatmul.f32.gmra.mxu0 %v453
    %v550 = vpop.f32.mrf.mxu0
    %v551 = vadd.f32 %v506, %v550
    %552 = vdwg.mxu0
    %553 = vmatpush.msra.mxu0 %v501
    %554 = vmatpush.msra.mxu0 %v498
    %555 = vmatpush.msra.mxu0 %v495
    %556 = vmatpush.msra.mxu0 %v492
    %557 = vmatpush.msra.mxu0 %v489
    %558 = vmatpush.msra.mxu0 %v486
    %559 = vmatpush.msra.mxu0 %v483
    %560 = vmatpush.msra.mxu0 %v480
    %561 = vmatpush.msra.mxu0 %v477
    %562 = vmatpush.msra.mxu0 %v474
    %563 = vmatpush.msra.mxu0 %v471
    %564 = vmatpush.msra.mxu0 %v468
    %565 = vmatpush.msra.mxu0 %v465
    %566 = vmatpush.msra.mxu0 %v462
    %567 = vmatpush.msra.mxu0 %v459
    %568 = vmatpush.msra.mxu0 %v456
    %569 = vmatmul.f32.gmra.mxu0 %v446
    %v570 = vpop.f32.mrf.mxu0
    %v571 = vadd.f32 %v507, %v570
    %572 = vmatmul.f32.gmra.mxu0 %v447
    %v573 = vpop.f32.mrf.mxu0
    %v574 = vadd.f32 %v507, %v573
    %575 = vmatmul.f32.gmra.mxu0 %v448
    %v576 = vpop.f32.mrf.mxu0
    %v577 = vadd.f32 %v507, %v576
    %578 = vmatmul.f32.gmra.mxu0 %v449
    %v579 = vpop.f32.mrf.mxu0
    %v580 = vadd.f32 %v507, %v579
    %581 = vmatmul.f32.gmra.mxu0 %v450
    %v582 = vpop.f32.mrf.mxu0
    %v583 = vadd.f32 %v507, %v582
    %584 = vmatmul.f32.gmra.mxu0 %v451
    %v585 = vpop.f32.mrf.mxu0
    %v586 = vadd.f32 %v507, %v585
    %587 = vmatmul.f32.gmra.mxu0 %v452
    %v588 = vpop.f32.mrf.mxu0
    %v589 = vadd.f32 %v507, %v588
    %590 = vmatmul.f32.gmra.mxu0 %v453
    %v591 = vpop.f32.mrf.mxu0
    %v592 = vadd.f32 %v507, %v591
    %593 = vdwg.mxu0
    %594 = vmatpush.msra.mxu0 %v502
    %595 = vmatpush.msra.mxu0 %v499
    %596 = vmatpush.msra.mxu0 %v496
    %597 = vmatpush.msra.mxu0 %v493
    %598 = vmatpush.msra.mxu0 %v490
    %599 = vmatpush.msra.mxu0 %v487
    %600 = vmatpush.msra.mxu0 %v484
    %601 = vmatpush.msra.mxu0 %v481
    %602 = vmatpush.msra.mxu0 %v478
    %603 = vmatpush.msra.mxu0 %v475
    %604 = vmatpush.msra.mxu0 %v472
    %605 = vmatpush.msra.mxu0 %v469
    %606 = vmatpush.msra.mxu0 %v466
    %607 = vmatpush.msra.mxu0 %v463
    %608 = vmatpush.msra.mxu0 %v460
    %609 = vmatpush.msra.mxu0 %v457
    %610 = vmatmul.f32.gmra.mxu0 %v446
    %v611 = vpop.f32.mrf.mxu0
    %v612 = vadd.f32 %v508, %v611
    %613 = vmatmul.f32.gmra.mxu0 %v447
    %v614 = vpop.f32.mrf.mxu0
    %v615 = vadd.f32 %v508, %v614
    %616 = vmatmul.f32.gmra.mxu0 %v448
    %v617 = vpop.f32.mrf.mxu0
    %v618 = vadd.f32 %v508, %v617
    %619 = vmatmul.f32.gmra.mxu0 %v449
    %v620 = vpop.f32.mrf.mxu0
    %v621 = vadd.f32 %v508, %v620
    %622 = vmatmul.f32.gmra.mxu0 %v450
    %v623 = vpop.f32.mrf.mxu0
    %v624 = vadd.f32 %v508, %v623
    %625 = vmatmul.f32.gmra.mxu0 %v451
    %v626 = vpop.f32.mrf.mxu0
    %v627 = vadd.f32 %v508, %v626
    %628 = vmatmul.f32.gmra.mxu0 %v452
    %v629 = vpop.f32.mrf.mxu0
    %v630 = vadd.f32 %v508, %v629
    %631 = vmatmul.f32.gmra.mxu0 %v453
    %v632 = vpop.f32.mrf.mxu0
    %v633 = vadd.f32 %v508, %v632
    %634 = vdwg.mxu0
    %635 = vst [vmem:[#allocation4] sm:$0xff] %v530
    %636 = vst [vmem:[#allocation4 + $0x8] sm:$0xff] %v571
    %637 = vst [vmem:[#allocation4 + $0x10] sm:$0xff] %v612
    %638 = vst [vmem:[#allocation4 + $0x18] sm:$0xff] %v533
    %639 = vst [vmem:[#allocation4 + $0x20] sm:$0xff] %v574
    %640 = vst [vmem:[#allocation4 + $0x28] sm:$0xff] %v615
    %641 = vst [vmem:[#allocation4 + $0x30] sm:$0xff] %v536
    %642 = vst [vmem:[#allocation4 + $0x38] sm:$0xff] %v577
    %643 = vst [vmem:[#allocation4 + $0x40] sm:$0xff] %v618
    %644 = vst [vmem:[#allocation4 + $0x48] sm:$0xff] %v539
    %645 = vst [vmem:[#allocation4 + $0x50] sm:$0xff] %v580
    %646 = vst [vmem:[#allocation4 + $0x58] sm:$0xff] %v621
    %647 = vst [vmem:[#allocation4 + $0x60] sm:$0xff] %v542
    %648 = vst [vmem:[#allocation4 + $0x68] sm:$0xff] %v583
    %649 = vst [vmem:[#allocation4 + $0x70] sm:$0xff] %v624
    %650 = vst [vmem:[#allocation4 + $0x78] sm:$0xff] %v545
    %651 = vst [vmem:[#allocation4 + $0x80] sm:$0xff] %v586
    %652 = vst [vmem:[#allocation4 + $0x88] sm:$0xff] %v627
    %653 = vst [vmem:[#allocation4 + $0x90] sm:$0xff] %v548
    %654 = vst [vmem:[#allocation4 + $0x98] sm:$0xff] %v589
    %655 = vst [vmem:[#allocation4 + $0xa0] sm:$0xff] %v630
    %656 = vst [vmem:[#allocation4 + $0xa8] sm:$0xff] %v551
    %657 = vst [vmem:[#allocation4 + $0xb0] sm:$0xff] %v592
    %658 = vst [vmem:[#allocation4 + $0xb8] sm:$0xff] %v633
    loop: start=0, step=1, limit=8
    $region37: #{_lambda_.2} parent=1 // loop_pre_header
      _
    $region38: #{_lambda_.2} parent=1 // loop_header
      %s660 = sphi 0, %s664
      %p661 = scmp.ge.s32.totalorder %s660, 8
    $region39: #{_lambda_.2} parent=1 // loop_header_branch
      %663 = sbr.rel (%p661) target = $region43
    $region40: #{_lambda_.2} parent=1 // loop_body
      %v665 = vld [vmem:[#allocation5] sm:$0xff]
      %s666 = smul.u32 %s660, 3
      %s667 = smul.addr %s666, 8
      %s668 = scalar_lea.vmem [#allocation4], %s667
      %v669 = vld [vmem:[%s668] sm:$0xff]
      %v670 = vld [vmem:[%s668 + $0x8] sm:$0xff]
      %v671 = vld [vmem:[%s668 + $0x10] sm:$0xff]
      %s672 = scalar_lea.vmem [#allocation8], 384
      %v673 = vld [vmem:[%s672] sm:$0xff]
      %v674 = vld [vmem:[%s672 + $0x8] sm:$0xff]
      %v675 = vld [vmem:[%s672 + $0x10] sm:$0xff]
      %v676 = vld [vmem:[%s672 + $0x18] sm:$0xff]
      %v677 = vld [vmem:[%s672 + $0x20] sm:$0xff]
      %v678 = vld [vmem:[%s672 + $0x28] sm:$0xff]
      %v679 = vld [vmem:[%s672 + $0x30] sm:$0xff]
      %v680 = vld [vmem:[%s672 + $0x38] sm:$0xff]
      %v681 = vld [vmem:[%s672 + $0x40] sm:$0xff]
      %v682 = vld [vmem:[%s672 + $0x48] sm:$0xff]
      %v683 = vld [vmem:[%s672 + $0x50] sm:$0xff]
      %v684 = vld [vmem:[%s672 + $0x58] sm:$0xff]
      %v685 = vld [vmem:[%s672 + $0x60] sm:$0xff]
      %v686 = vld [vmem:[%s672 + $0x68] sm:$0xff]
      %v687 = vld [vmem:[%s672 + $0x70] sm:$0xff]
      %v688 = vld [vmem:[%s672 + $0x78] sm:$0xff]
      %v689 = vld [vmem:[%s672 + $0x80] sm:$0xff]
      %v690 = vld [vmem:[%s672 + $0x88] sm:$0xff]
      %v691 = vld [vmem:[%s672 + $0x90] sm:$0xff]
      %v692 = vld [vmem:[%s672 + $0x98] sm:$0xff]
      %v693 = vld [vmem:[%s672 + $0xa0] sm:$0xff]
      %v694 = vld [vmem:[%s672 + $0xa8] sm:$0xff]
      %v695 = vld [vmem:[%s672 + $0xb0] sm:$0xff]
      %v696 = vld [vmem:[%s672 + $0xb8] sm:$0xff]
      %v697 = vld [vmem:[%s672 + $0xc0] sm:$0xff]
      %v698 = vld [vmem:[%s672 + $0xc8] sm:$0xff]
      %v699 = vld [vmem:[%s672 + $0xd0] sm:$0xff]
      %v700 = vld [vmem:[%s672 + $0xd8] sm:$0xff]
      %v701 = vld [vmem:[%s672 + $0xe0] sm:$0xff]
      %v702 = vld [vmem:[%s672 + $0xe8] sm:$0xff]
      %v703 = vld [vmem:[%s672 + $0xf0] sm:$0xff]
      %v704 = vld [vmem:[%s672 + $0xf8] sm:$0xff]
      %v705 = vld [vmem:[%s672 + $0x100] sm:$0xff]
      %v706 = vld [vmem:[%s672 + $0x108] sm:$0xff]
      %v707 = vld [vmem:[%s672 + $0x110] sm:$0xff]
      %v708 = vld [vmem:[%s672 + $0x118] sm:$0xff]
      %v709 = vld [vmem:[%s672 + $0x120] sm:$0xff]
      %v710 = vld [vmem:[%s672 + $0x128] sm:$0xff]
      %v711 = vld [vmem:[%s672 + $0x130] sm:$0xff]
      %v712 = vld [vmem:[%s672 + $0x138] sm:$0xff]
      %v713 = vld [vmem:[%s672 + $0x140] sm:$0xff]
      %v714 = vld [vmem:[%s672 + $0x148] sm:$0xff]
      %v715 = vld [vmem:[%s672 + $0x150] sm:$0xff]
      %v716 = vld [vmem:[%s672 + $0x158] sm:$0xff]
      %v717 = vld [vmem:[%s672 + $0x160] sm:$0xff]
      %v718 = vld [vmem:[%s672 + $0x168] sm:$0xff]
      %v719 = vld [vmem:[%s672 + $0x170] sm:$0xff]
      %v720 = vld [vmem:[%s672 + $0x178] sm:$0xff]
      %721 = vmatpush.msra.mxu0 %v718
      %722 = vmatpush.msra.mxu0 %v715
      %723 = vmatpush.msra.mxu0 %v712
      %724 = vmatpush.msra.mxu0 %v709
      %725 = vmatpush.msra.mxu0 %v706
      %726 = vmatpush.msra.mxu0 %v703
      %727 = vmatpush.msra.mxu0 %v700
      %728 = vmatpush.msra.mxu0 %v697
      %729 = vmatpush.msra.mxu0 %v694
      %730 = vmatpush.msra.mxu0 %v691
      %731 = vmatpush.msra.mxu0 %v688
      %732 = vmatpush.msra.mxu0 %v685
      %733 = vmatpush.msra.mxu0 %v682
      %734 = vmatpush.msra.mxu0 %v679
      %735 = vmatpush.msra.mxu0 %v676
      %736 = vmatpush.msra.mxu0 %v673
      %737 = vmatmul.f32.gmra.mxu0 %v665
      %v738 = vpop.f32.mrf.mxu0
      %v739 = vadd.f32 0.0, %v738
      %740 = vdwg.mxu0
      %741 = vmatpush.msra.mxu0 %v719
      %742 = vmatpush.msra.mxu0 %v716
      %743 = vmatpush.msra.mxu0 %v713
      %744 = vmatpush.msra.mxu0 %v710
      %745 = vmatpush.msra.mxu0 %v707
      %746 = vmatpush.msra.mxu0 %v704
      %747 = vmatpush.msra.mxu0 %v701
      %748 = vmatpush.msra.mxu0 %v698
      %749 = vmatpush.msra.mxu0 %v695
      %750 = vmatpush.msra.mxu0 %v692
      %751 = vmatpush.msra.mxu0 %v689
      %752 = vmatpush.msra.mxu0 %v686
      %753 = vmatpush.msra.mxu0 %v683
      %754 = vmatpush.msra.mxu0 %v680
      %755 = vmatpush.msra.mxu0 %v677
      %756 = vmatpush.msra.mxu0 %v674
      %757 = vmatmul.f32.gmra.mxu0 %v665
      %v758 = vpop.f32.mrf.mxu0
      %v759 = vadd.f32 0.0, %v758
      %760 = vdwg.mxu0
      %761 = vmatpush.msra.mxu0 %v720
      %762 = vmatpush.msra.mxu0 %v717
      %763 = vmatpush.msra.mxu0 %v714
      %764 = vmatpush.msra.mxu0 %v711
      %765 = vmatpush.msra.mxu0 %v708
      %766 = vmatpush.msra.mxu0 %v705
      %767 = vmatpush.msra.mxu0 %v702
      %768 = vmatpush.msra.mxu0 %v699
      %769 = vmatpush.msra.mxu0 %v696
      %770 = vmatpush.msra.mxu0 %v693
      %771 = vmatpush.msra.mxu0 %v690
      %772 = vmatpush.msra.mxu0 %v687
      %773 = vmatpush.msra.mxu0 %v684
      %774 = vmatpush.msra.mxu0 %v681
      %775 = vmatpush.msra.mxu0 %v678
      %776 = vmatpush.msra.mxu0 %v675
      %777 = vmatmul.f32.gmra.mxu0 %v665
      %v778 = vpop.f32.mrf.mxu0
      %v779 = vadd.f32 0.0, %v778
      %780 = vdwg.mxu0
      %v781 = vadd.f32 %v669, %v739
      %v782 = vxor.u32 %v781, 2147483648
      %v783 = vmul.f32 %v782, 1.442695
      %v784 = vpow.pop %v783
      %v785 = vadd.f32 %v784, 1.0
      %v786 = vrcp.pop %v785
      %v787 = vmul.f32 %v785, %v786
      %v788 = vsub.f32 1.0, %v787
      %v789 = vmul.f32 %v786, %v788
      %v790 = vadd.f32 %v786, %v789
      %vm791 = vweird.f32 %v785
      %vm792 = vweird.f32 %v786
      %vm793 = vmor %vm791, %vm792
      %v794 = vsel %vm793, %v786, %v790
      %v795 = vand.u32 2147483647, %v785
      %vm796 = vcmp.eq.f32.partialorder %v795, 8.507059e+37
      %v797 = vand.u32 %v785, 2147483648
      %v798 = vor.u32 1.1754944e-38, %v797
      %v799 = vsel %vm796, %v798, %v794
      %v800 = vmul.f32 1.0, %v799
      %v801 = vadd.f32 %v670, %v759
      %v802 = vxor.u32 %v801, 2147483648
      %v803 = vmul.f32 %v802, 1.442695
      %v804 = vpow.pop %v803
      %v805 = vadd.f32 %v804, 1.0
      %v806 = vrcp.pop %v805
      %v807 = vmul.f32 %v805, %v806
      %v808 = vsub.f32 1.0, %v807
      %v809 = vmul.f32 %v806, %v808
      %v810 = vadd.f32 %v806, %v809
      %vm811 = vweird.f32 %v805
      %vm812 = vweird.f32 %v806
      %vm813 = vmor %vm811, %vm812
      %v814 = vsel %vm813, %v806, %v810
      %v815 = vand.u32 2147483647, %v805
      %vm816 = vcmp.eq.f32.partialorder %v815, 8.507059e+37
      %v817 = vand.u32 %v805, 2147483648
      %v818 = vor.u32 1.1754944e-38, %v817
      %v819 = vsel %vm816, %v818, %v814
      %v820 = vmul.f32 1.0, %v819
      %s821 = scalar_lea.vmem %s4, 1
      %v822 = vld [vmem:[%s821] sm:$0x1]
      %v824 = vperm.slane %v822, 0
      %v826 = vadd.f32 %v779, %v824
      %v827 = vmul.f32 %v800, %v826
      %v828 = vadd.f32 %v671, %v827
      %v829 = vtanh.pop %v828
      %v830 = vsub.f32 1.0, %v820
      %v831 = vmul.f32 %v830, %v829
      %v832 = vmul.f32 %v820, %v665
      %v833 = vadd.f32 %v831, %v832
      %834 = vst [vmem:[#allocation5] sm:$0xff] %v833
      %s835 = sadd.s32 0, %s660
      %s836 = smul.u32 %s835, 8
      %s837 = scalar_lea.vmem [#allocation3], %s836
      %838 = vst [vmem:[%s837] sm:$0xff] %v833
    $region41: #{_lambda_.2} parent=1 // loop_footer
      %s664 = sadd.s32 1, %s660
    $region42: #{_lambda_.2} parent=1 // loop_footer_branch
      %659 = sbr.rel target = $region38
    $region43: #{_lambda_.2} parent=1 // loop_exit
      _
    %839 = vst [vmem:[#allocation5] sm:$0xff] 0.0
    %s840 = scalar_lea.vmem [#allocation3], %s53
    %v841 = vld [vmem:[%s840] sm:$0xff]
    %v842 = vld [vmem:[%s840 + $0x8] sm:$0xff]
    %v843 = vld [vmem:[%s840 + $0x10] sm:$0xff]
    %v844 = vld [vmem:[%s840 + $0x18] sm:$0xff]
    %v845 = vld [vmem:[%s840 + $0x20] sm:$0xff]
    %v846 = vld [vmem:[%s840 + $0x28] sm:$0xff]
    %v847 = vld [vmem:[%s840 + $0x30] sm:$0xff]
    %v848 = vld [vmem:[%s840 + $0x38] sm:$0xff]
    %s849 = scalar_lea.vmem [#allocation6], 768
    %v850 = vld [vmem:[%s849] sm:$0xff]
    %v851 = vld [vmem:[%s849 + $0x8] sm:$0xff]
    %v852 = vld [vmem:[%s849 + $0x10] sm:$0xff]
    %v853 = vld [vmem:[%s849 + $0x18] sm:$0xff]
    %v854 = vld [vmem:[%s849 + $0x20] sm:$0xff]
    %v855 = vld [vmem:[%s849 + $0x28] sm:$0xff]
    %v856 = vld [vmem:[%s849 + $0x30] sm:$0xff]
    %v857 = vld [vmem:[%s849 + $0x38] sm:$0xff]
    %v858 = vld [vmem:[%s849 + $0x40] sm:$0xff]
    %v859 = vld [vmem:[%s849 + $0x48] sm:$0xff]
    %v860 = vld [vmem:[%s849 + $0x50] sm:$0xff]
    %v861 = vld [vmem:[%s849 + $0x58] sm:$0xff]
    %v862 = vld [vmem:[%s849 + $0x60] sm:$0xff]
    %v863 = vld [vmem:[%s849 + $0x68] sm:$0xff]
    %v864 = vld [vmem:[%s849 + $0x70] sm:$0xff]
    %v865 = vld [vmem:[%s849 + $0x78] sm:$0xff]
    %v866 = vld [vmem:[%s849 + $0x80] sm:$0xff]
    %v867 = vld [vmem:[%s849 + $0x88] sm:$0xff]
    %v868 = vld [vmem:[%s849 + $0x90] sm:$0xff]
    %v869 = vld [vmem:[%s849 + $0x98] sm:$0xff]
    %v870 = vld [vmem:[%s849 + $0xa0] sm:$0xff]
    %v871 = vld [vmem:[%s849 + $0xa8] sm:$0xff]
    %v872 = vld [vmem:[%s849 + $0xb0] sm:$0xff]
    %v873 = vld [vmem:[%s849 + $0xb8] sm:$0xff]
    %v874 = vld [vmem:[%s849 + $0xc0] sm:$0xff]
    %v875 = vld [vmem:[%s849 + $0xc8] sm:$0xff]
    %v876 = vld [vmem:[%s849 + $0xd0] sm:$0xff]
    %v877 = vld [vmem:[%s849 + $0xd8] sm:$0xff]
    %v878 = vld [vmem:[%s849 + $0xe0] sm:$0xff]
    %v879 = vld [vmem:[%s849 + $0xe8] sm:$0xff]
    %v880 = vld [vmem:[%s849 + $0xf0] sm:$0xff]
    %v881 = vld [vmem:[%s849 + $0xf8] sm:$0xff]
    %v882 = vld [vmem:[%s849 + $0x100] sm:$0xff]
    %v883 = vld [vmem:[%s849 + $0x108] sm:$0xff]
    %v884 = vld [vmem:[%s849 + $0x110] sm:$0xff]
    %v885 = vld [vmem:[%s849 + $0x118] sm:$0xff]
    %v886 = vld [vmem:[%s849 + $0x120] sm:$0xff]
    %v887 = vld [vmem:[%s849 + $0x128] sm:$0xff]
    %v888 = vld [vmem:[%s849 + $0x130] sm:$0xff]
    %v889 = vld [vmem:[%s849 + $0x138] sm:$0xff]
    %v890 = vld [vmem:[%s849 + $0x140] sm:$0xff]
    %v891 = vld [vmem:[%s849 + $0x148] sm:$0xff]
    %v892 = vld [vmem:[%s849 + $0x150] sm:$0xff]
    %v893 = vld [vmem:[%s849 + $0x158] sm:$0xff]
    %v894 = vld [vmem:[%s849 + $0x160] sm:$0xff]
    %v895 = vld [vmem:[%s849 + $0x168] sm:$0xff]
    %v896 = vld [vmem:[%s849 + $0x170] sm:$0xff]
    %v897 = vld [vmem:[%s849 + $0x178] sm:$0xff]
    %s898 = scalar_lea.vmem %s3, 6
    %v899 = vld [vmem:[%s898] sm:$0x7]
    %v901 = vperm.slane %v899, 0
    %v902 = vperm.slane %v899, 1
    %v903 = vperm.slane %v899, 2
    %907 = vmatpush.msra.mxu0 %v895
    %908 = vmatpush.msra.mxu0 %v892
    %909 = vmatpush.msra.mxu0 %v889
    %910 = vmatpush.msra.mxu0 %v886
    %911 = vmatpush.msra.mxu0 %v883
    %912 = vmatpush.msra.mxu0 %v880
    %913 = vmatpush.msra.mxu0 %v877
    %914 = vmatpush.msra.mxu0 %v874
    %915 = vmatpush.msra.mxu0 %v871
    %916 = vmatpush.msra.mxu0 %v868
    %917 = vmatpush.msra.mxu0 %v865
    %918 = vmatpush.msra.mxu0 %v862
    %919 = vmatpush.msra.mxu0 %v859
    %920 = vmatpush.msra.mxu0 %v856
    %921 = vmatpush.msra.mxu0 %v853
    %922 = vmatpush.msra.mxu0 %v850
    %923 = vmatmul.f32.gmra.mxu0 %v841
    %v924 = vpop.f32.mrf.mxu0
    %v925 = vadd.f32 %v901, %v924
    %926 = vmatmul.f32.gmra.mxu0 %v842
    %v927 = vpop.f32.mrf.mxu0
    %v928 = vadd.f32 %v901, %v927
    %929 = vmatmul.f32.gmra.mxu0 %v843
    %v930 = vpop.f32.mrf.mxu0
    %v931 = vadd.f32 %v901, %v930
    %932 = vmatmul.f32.gmra.mxu0 %v844
    %v933 = vpop.f32.mrf.mxu0
    %v934 = vadd.f32 %v901, %v933
    %935 = vmatmul.f32.gmra.mxu0 %v845
    %v936 = vpop.f32.mrf.mxu0
    %v937 = vadd.f32 %v901, %v936
    %938 = vmatmul.f32.gmra.mxu0 %v846
    %v939 = vpop.f32.mrf.mxu0
    %v940 = vadd.f32 %v901, %v939
    %941 = vmatmul.f32.gmra.mxu0 %v847
    %v942 = vpop.f32.mrf.mxu0
    %v943 = vadd.f32 %v901, %v942
    %944 = vmatmul.f32.gmra.mxu0 %v848
    %v945 = vpop.f32.mrf.mxu0
    %v946 = vadd.f32 %v901, %v945
    %947 = vdwg.mxu0
    %948 = vmatpush.msra.mxu0 %v896
    %949 = vmatpush.msra.mxu0 %v893
    %950 = vmatpush.msra.mxu0 %v890
    %951 = vmatpush.msra.mxu0 %v887
    %952 = vmatpush.msra.mxu0 %v884
    %953 = vmatpush.msra.mxu0 %v881
    %954 = vmatpush.msra.mxu0 %v878
    %955 = vmatpush.msra.mxu0 %v875
    %956 = vmatpush.msra.mxu0 %v872
    %957 = vmatpush.msra.mxu0 %v869
    %958 = vmatpush.msra.mxu0 %v866
    %959 = vmatpush.msra.mxu0 %v863
    %960 = vmatpush.msra.mxu0 %v860
    %961 = vmatpush.msra.mxu0 %v857
    %962 = vmatpush.msra.mxu0 %v854
    %963 = vmatpush.msra.mxu0 %v851
    %964 = vmatmul.f32.gmra.mxu0 %v841
    %v965 = vpop.f32.mrf.mxu0
    %v966 = vadd.f32 %v902, %v965
    %967 = vmatmul.f32.gmra.mxu0 %v842
    %v968 = vpop.f32.mrf.mxu0
    %v969 = vadd.f32 %v902, %v968
    %970 = vmatmul.f32.gmra.mxu0 %v843
    %v971 = vpop.f32.mrf.mxu0
    %v972 = vadd.f32 %v902, %v971
    %973 = vmatmul.f32.gmra.mxu0 %v844
    %v974 = vpop.f32.mrf.mxu0
    %v975 = vadd.f32 %v902, %v974
    %976 = vmatmul.f32.gmra.mxu0 %v845
    %v977 = vpop.f32.mrf.mxu0
    %v978 = vadd.f32 %v902, %v977
    %979 = vmatmul.f32.gmra.mxu0 %v846
    %v980 = vpop.f32.mrf.mxu0
    %v981 = vadd.f32 %v902, %v980
    %982 = vmatmul.f32.gmra.mxu0 %v847
    %v983 = vpop.f32.mrf.mxu0
    %v984 = vadd.f32 %v902, %v983
    %985 = vmatmul.f32.gmra.mxu0 %v848
    %v986 = vpop.f32.mrf.mxu0
    %v987 = vadd.f32 %v902, %v986
    %988 = vdwg.mxu0
    %989 = vmatpush.msra.mxu0 %v897
    %990 = vmatpush.msra.mxu0 %v894
    %991 = vmatpush.msra.mxu0 %v891
    %992 = vmatpush.msra.mxu0 %v888
    %993 = vmatpush.msra.mxu0 %v885
    %994 = vmatpush.msra.mxu0 %v882
    %995 = vmatpush.msra.mxu0 %v879
    %996 = vmatpush.msra.mxu0 %v876
    %997 = vmatpush.msra.mxu0 %v873
    %998 = vmatpush.msra.mxu0 %v870
    %999 = vmatpush.msra.mxu0 %v867
    %1000 = vmatpush.msra.mxu0 %v864
    %1001 = vmatpush.msra.mxu0 %v861
    %1002 = vmatpush.msra.mxu0 %v858
    %1003 = vmatpush.msra.mxu0 %v855
    %1004 = vmatpush.msra.mxu0 %v852
    %1005 = vmatmul.f32.gmra.mxu0 %v841
    %v1006 = vpop.f32.mrf.mxu0
    %v1007 = vadd.f32 %v903, %v1006
    %1008 = vmatmul.f32.gmra.mxu0 %v842
    %v1009 = vpop.f32.mrf.mxu0
    %v1010 = vadd.f32 %v903, %v1009
    %1011 = vmatmul.f32.gmra.mxu0 %v843
    %v1012 = vpop.f32.mrf.mxu0
    %v1013 = vadd.f32 %v903, %v1012
    %1014 = vmatmul.f32.gmra.mxu0 %v844
    %v1015 = vpop.f32.mrf.mxu0
    %v1016 = vadd.f32 %v903, %v1015
    %1017 = vmatmul.f32.gmra.mxu0 %v845
    %v1018 = vpop.f32.mrf.mxu0
    %v1019 = vadd.f32 %v903, %v1018
    %1020 = vmatmul.f32.gmra.mxu0 %v846
    %v1021 = vpop.f32.mrf.mxu0
    %v1022 = vadd.f32 %v903, %v1021
    %1023 = vmatmul.f32.gmra.mxu0 %v847
    %v1024 = vpop.f32.mrf.mxu0
    %v1025 = vadd.f32 %v903, %v1024
    %1026 = vmatmul.f32.gmra.mxu0 %v848
    %v1027 = vpop.f32.mrf.mxu0
    %v1028 = vadd.f32 %v903, %v1027
    %1029 = vdwg.mxu0
    %1030 = vst [vmem:[#allocation4] sm:$0xff] %v925
    %1031 = vst [vmem:[#allocation4 + $0x8] sm:$0xff] %v966
    %1032 = vst [vmem:[#allocation4 + $0x10] sm:$0xff] %v1007
    %1033 = vst [vmem:[#allocation4 + $0x18] sm:$0xff] %v928
    %1034 = vst [vmem:[#allocation4 + $0x20] sm:$0xff] %v969
    %1035 = vst [vmem:[#allocation4 + $0x28] sm:$0xff] %v1010
    %1036 = vst [vmem:[#allocation4 + $0x30] sm:$0xff] %v931
    %1037 = vst [vmem:[#allocation4 + $0x38] sm:$0xff] %v972
    %1038 = vst [vmem:[#allocation4 + $0x40] sm:$0xff] %v1013
    %1039 = vst [vmem:[#allocation4 + $0x48] sm:$0xff] %v934
    %1040 = vst [vmem:[#allocation4 + $0x50] sm:$0xff] %v975
    %1041 = vst [vmem:[#allocation4 + $0x58] sm:$0xff] %v1016
    %1042 = vst [vmem:[#allocation4 + $0x60] sm:$0xff] %v937
    %1043 = vst [vmem:[#allocation4 + $0x68] sm:$0xff] %v978
    %1044 = vst [vmem:[#allocation4 + $0x70] sm:$0xff] %v1019
    %1045 = vst [vmem:[#allocation4 + $0x78] sm:$0xff] %v940
    %1046 = vst [vmem:[#allocation4 + $0x80] sm:$0xff] %v981
    %1047 = vst [vmem:[#allocation4 + $0x88] sm:$0xff] %v1022
    %1048 = vst [vmem:[#allocation4 + $0x90] sm:$0xff] %v943
    %1049 = vst [vmem:[#allocation4 + $0x98] sm:$0xff] %v984
    %1050 = vst [vmem:[#allocation4 + $0xa0] sm:$0xff] %v1025
    %1051 = vst [vmem:[#allocation4 + $0xa8] sm:$0xff] %v946
    %1052 = vst [vmem:[#allocation4 + $0xb0] sm:$0xff] %v987
    %1053 = vst [vmem:[#allocation4 + $0xb8] sm:$0xff] %v1028
    loop: start=0, step=1, limit=8
    $region44: #{_lambda_.2} parent=1 // loop_pre_header
      _
    $region45: #{_lambda_.2} parent=1 // loop_header
      %s1055 = sphi 0, %s1059
      %p1056 = scmp.ge.s32.totalorder %s1055, 8
    $region46: #{_lambda_.2} parent=1 // loop_header_branch
      %1058 = sbr.rel (%p1056) target = $region50
    $region47: #{_lambda_.2} parent=1 // loop_body
      %v1060 = vld [vmem:[#allocation5] sm:$0xff]
      %s1061 = smul.u32 %s1055, 3
      %s1062 = smul.addr %s1061, 8
      %s1063 = scalar_lea.vmem [#allocation4], %s1062
      %v1064 = vld [vmem:[%s1063] sm:$0xff]
      %v1065 = vld [vmem:[%s1063 + $0x8] sm:$0xff]
      %v1066 = vld [vmem:[%s1063 + $0x10] sm:$0xff]
      %s1067 = scalar_lea.vmem [#allocation8], 768
      %v1068 = vld [vmem:[%s1067] sm:$0xff]
      %v1069 = vld [vmem:[%s1067 + $0x8] sm:$0xff]
      %v1070 = vld [vmem:[%s1067 + $0x10] sm:$0xff]
      %v1071 = vld [vmem:[%s1067 + $0x18] sm:$0xff]
      %v1072 = vld [vmem:[%s1067 + $0x20] sm:$0xff]
      %v1073 = vld [vmem:[%s1067 + $0x28] sm:$0xff]
      %v1074 = vld [vmem:[%s1067 + $0x30] sm:$0xff]
      %v1075 = vld [vmem:[%s1067 + $0x38] sm:$0xff]
      %v1076 = vld [vmem:[%s1067 + $0x40] sm:$0xff]
      %v1077 = vld [vmem:[%s1067 + $0x48] sm:$0xff]
      %v1078 = vld [vmem:[%s1067 + $0x50] sm:$0xff]
      %v1079 = vld [vmem:[%s1067 + $0x58] sm:$0xff]
      %v1080 = vld [vmem:[%s1067 + $0x60] sm:$0xff]
      %v1081 = vld [vmem:[%s1067 + $0x68] sm:$0xff]
      %v1082 = vld [vmem:[%s1067 + $0x70] sm:$0xff]
      %v1083 = vld [vmem:[%s1067 + $0x78] sm:$0xff]
      %v1084 = vld [vmem:[%s1067 + $0x80] sm:$0xff]
      %v1085 = vld [vmem:[%s1067 + $0x88] sm:$0xff]
      %v1086 = vld [vmem:[%s1067 + $0x90] sm:$0xff]
      %v1087 = vld [vmem:[%s1067 + $0x98] sm:$0xff]
      %v1088 = vld [vmem:[%s1067 + $0xa0] sm:$0xff]
      %v1089 = vld [vmem:[%s1067 + $0xa8] sm:$0xff]
      %v1090 = vld [vmem:[%s1067 + $0xb0] sm:$0xff]
      %v1091 = vld [vmem:[%s1067 + $0xb8] sm:$0xff]
      %v1092 = vld [vmem:[%s1067 + $0xc0] sm:$0xff]
      %v1093 = vld [vmem:[%s1067 + $0xc8] sm:$0xff]
      %v1094 = vld [vmem:[%s1067 + $0xd0] sm:$0xff]
      %v1095 = vld [vmem:[%s1067 + $0xd8] sm:$0xff]
      %v1096 = vld [vmem:[%s1067 + $0xe0] sm:$0xff]
      %v1097 = vld [vmem:[%s1067 + $0xe8] sm:$0xff]
      %v1098 = vld [vmem:[%s1067 + $0xf0] sm:$0xff]
      %v1099 = vld [vmem:[%s1067 + $0xf8] sm:$0xff]
      %v1100 = vld [vmem:[%s1067 + $0x100] sm:$0xff]
      %v1101 = vld [vmem:[%s1067 + $0x108] sm:$0xff]
      %v1102 = vld [vmem:[%s1067 + $0x110] sm:$0xff]
      %v1103 = vld [vmem:[%s1067 + $0x118] sm:$0xff]
      %v1104 = vld [vmem:[%s1067 + $0x120] sm:$0xff]
      %v1105 = vld [vmem:[%s1067 + $0x128] sm:$0xff]
      %v1106 = vld [vmem:[%s1067 + $0x130] sm:$0xff]
      %v1107 = vld [vmem:[%s1067 + $0x138] sm:$0xff]
      %v1108 = vld [vmem:[%s1067 + $0x140] sm:$0xff]
      %v1109 = vld [vmem:[%s1067 + $0x148] sm:$0xff]
      %v1110 = vld [vmem:[%s1067 + $0x150] sm:$0xff]
      %v1111 = vld [vmem:[%s1067 + $0x158] sm:$0xff]
      %v1112 = vld [vmem:[%s1067 + $0x160] sm:$0xff]
      %v1113 = vld [vmem:[%s1067 + $0x168] sm:$0xff]
      %v1114 = vld [vmem:[%s1067 + $0x170] sm:$0xff]
      %v1115 = vld [vmem:[%s1067 + $0x178] sm:$0xff]
      %1116 = vmatpush.msra.mxu0 %v1113
      %1117 = vmatpush.msra.mxu0 %v1110
      %1118 = vmatpush.msra.mxu0 %v1107
      %1119 = vmatpush.msra.mxu0 %v1104
      %1120 = vmatpush.msra.mxu0 %v1101
      %1121 = vmatpush.msra.mxu0 %v1098
      %1122 = vmatpush.msra.mxu0 %v1095
      %1123 = vmatpush.msra.mxu0 %v1092
      %1124 = vmatpush.msra.mxu0 %v1089
      %1125 = vmatpush.msra.mxu0 %v1086
      %1126 = vmatpush.msra.mxu0 %v1083
      %1127 = vmatpush.msra.mxu0 %v1080
      %1128 = vmatpush.msra.mxu0 %v1077
      %1129 = vmatpush.msra.mxu0 %v1074
      %1130 = vmatpush.msra.mxu0 %v1071
      %1131 = vmatpush.msra.mxu0 %v1068
      %1132 = vmatmul.f32.gmra.mxu0 %v1060
      %v1133 = vpop.f32.mrf.mxu0
      %v1134 = vadd.f32 0.0, %v1133
      %1135 = vdwg.mxu0
      %1136 = vmatpush.msra.mxu0 %v1114
      %1137 = vmatpush.msra.mxu0 %v1111
      %1138 = vmatpush.msra.mxu0 %v1108
      %1139 = vmatpush.msra.mxu0 %v1105
      %1140 = vmatpush.msra.mxu0 %v1102
      %1141 = vmatpush.msra.mxu0 %v1099
      %1142 = vmatpush.msra.mxu0 %v1096
      %1143 = vmatpush.msra.mxu0 %v1093
      %1144 = vmatpush.msra.mxu0 %v1090
      %1145 = vmatpush.msra.mxu0 %v1087
      %1146 = vmatpush.msra.mxu0 %v1084
      %1147 = vmatpush.msra.mxu0 %v1081
      %1148 = vmatpush.msra.mxu0 %v1078
      %1149 = vmatpush.msra.mxu0 %v1075
      %1150 = vmatpush.msra.mxu0 %v1072
      %1151 = vmatpush.msra.mxu0 %v1069
      %1152 = vmatmul.f32.gmra.mxu0 %v1060
      %v1153 = vpop.f32.mrf.mxu0
      %v1154 = vadd.f32 0.0, %v1153
      %1155 = vdwg.mxu0
      %1156 = vmatpush.msra.mxu0 %v1115
      %1157 = vmatpush.msra.mxu0 %v1112
      %1158 = vmatpush.msra.mxu0 %v1109
      %1159 = vmatpush.msra.mxu0 %v1106
      %1160 = vmatpush.msra.mxu0 %v1103
      %1161 = vmatpush.msra.mxu0 %v1100
      %1162 = vmatpush.msra.mxu0 %v1097
      %1163 = vmatpush.msra.mxu0 %v1094
      %1164 = vmatpush.msra.mxu0 %v1091
      %1165 = vmatpush.msra.mxu0 %v1088
      %1166 = vmatpush.msra.mxu0 %v1085
      %1167 = vmatpush.msra.mxu0 %v1082
      %1168 = vmatpush.msra.mxu0 %v1079
      %1169 = vmatpush.msra.mxu0 %v1076
      %1170 = vmatpush.msra.mxu0 %v1073
      %1171 = vmatpush.msra.mxu0 %v1070
      %1172 = vmatmul.f32.gmra.mxu0 %v1060
      %v1173 = vpop.f32.mrf.mxu0
      %v1174 = vadd.f32 0.0, %v1173
      %1175 = vdwg.mxu0
      %v1176 = vadd.f32 %v1064, %v1134
      %v1177 = vxor.u32 %v1176, 2147483648
      %v1178 = vmul.f32 %v1177, 1.442695
      %v1179 = vpow.pop %v1178
      %v1180 = vadd.f32 %v1179, 1.0
      %v1181 = vrcp.pop %v1180
      %v1182 = vmul.f32 %v1180, %v1181
      %v1183 = vsub.f32 1.0, %v1182
      %v1184 = vmul.f32 %v1181, %v1183
      %v1185 = vadd.f32 %v1181, %v1184
      %vm1186 = vweird.f32 %v1180
      %vm1187 = vweird.f32 %v1181
      %vm1188 = vmor %vm1186, %vm1187
      %v1189 = vsel %vm1188, %v1181, %v1185
      %v1190 = vand.u32 2147483647, %v1180
      %vm1191 = vcmp.eq.f32.partialorder %v1190, 8.507059e+37
      %v1192 = vand.u32 %v1180, 2147483648
      %v1193 = vor.u32 1.1754944e-38, %v1192
      %v1194 = vsel %vm1191, %v1193, %v1189
      %v1195 = vmul.f32 1.0, %v1194
      %v1196 = vadd.f32 %v1065, %v1154
      %v1197 = vxor.u32 %v1196, 2147483648
      %v1198 = vmul.f32 %v1197, 1.442695
      %v1199 = vpow.pop %v1198
      %v1200 = vadd.f32 %v1199, 1.0
      %v1201 = vrcp.pop %v1200
      %v1202 = vmul.f32 %v1200, %v1201
      %v1203 = vsub.f32 1.0, %v1202
      %v1204 = vmul.f32 %v1201, %v1203
      %v1205 = vadd.f32 %v1201, %v1204
      %vm1206 = vweird.f32 %v1200
      %vm1207 = vweird.f32 %v1201
      %vm1208 = vmor %vm1206, %vm1207
      %v1209 = vsel %vm1208, %v1201, %v1205
      %v1210 = vand.u32 2147483647, %v1200
      %vm1211 = vcmp.eq.f32.partialorder %v1210, 8.507059e+37
      %v1212 = vand.u32 %v1200, 2147483648
      %v1213 = vor.u32 1.1754944e-38, %v1212
      %v1214 = vsel %vm1211, %v1213, %v1209
      %v1215 = vmul.f32 1.0, %v1214
      %s1216 = scalar_lea.vmem %s4, 2
      %v1217 = vld [vmem:[%s1216] sm:$0x1]
      %v1219 = vperm.slane %v1217, 0
      %v1221 = vadd.f32 %v1174, %v1219
      %v1222 = vmul.f32 %v1195, %v1221
      %v1223 = vadd.f32 %v1066, %v1222
      %v1224 = vtanh.pop %v1223
      %v1225 = vsub.f32 1.0, %v1215
      %v1226 = vmul.f32 %v1225, %v1224
      %v1227 = vmul.f32 %v1215, %v1060
      %v1228 = vadd.f32 %v1226, %v1227
      %1229 = vst [vmem:[#allocation5] sm:$0xff] %v1228
      %s1230 = sadd.s32 0, %s1055
      %s1231 = smul.u32 %s1230, 8
      %s1232 = scalar_lea.vmem [#allocation2], %s1231
      %1233 = vst [vmem:[%s1232] sm:$0xff] %v1228
    $region48: #{_lambda_.2} parent=1 // loop_footer
      %s1059 = sadd.s32 1, %s1055
    $region49: #{_lambda_.2} parent=1 // loop_footer_branch
      %1054 = sbr.rel target = $region45
    $region50: #{_lambda_.2} parent=1 // loop_exit
      _
    %1234 = vst [vmem:[#allocation5] sm:$0xff] 0.0
    %v1235 = vld [vmem:[%s445] sm:$0xff]
    %v1236 = vld [vmem:[%s445 + $0x8] sm:$0xff]
    %v1237 = vld [vmem:[%s445 + $0x10] sm:$0xff]
    %v1238 = vld [vmem:[%s445 + $0x18] sm:$0xff]
    %v1239 = vld [vmem:[%s445 + $0x20] sm:$0xff]
    %v1240 = vld [vmem:[%s445 + $0x28] sm:$0xff]
    %v1241 = vld [vmem:[%s445 + $0x30] sm:$0xff]
    %v1242 = vld [vmem:[%s445 + $0x38] sm:$0xff]
    %s1243 = scalar_lea.vmem [#allocation6], 1152
    %v1244 = vld [vmem:[%s1243] sm:$0xff]
    %v1245 = vld [vmem:[%s1243 + $0x8] sm:$0xff]
    %v1246 = vld [vmem:[%s1243 + $0x10] sm:$0xff]
    %v1247 = vld [vmem:[%s1243 + $0x18] sm:$0xff]
    %v1248 = vld [vmem:[%s1243 + $0x20] sm:$0xff]
    %v1249 = vld [vmem:[%s1243 + $0x28] sm:$0xff]
    %v1250 = vld [vmem:[%s1243 + $0x30] sm:$0xff]
    %v1251 = vld [vmem:[%s1243 + $0x38] sm:$0xff]
    %v1252 = vld [vmem:[%s1243 + $0x40] sm:$0xff]
    %v1253 = vld [vmem:[%s1243 + $0x48] sm:$0xff]
    %v1254 = vld [vmem:[%s1243 + $0x50] sm:$0xff]
    %v1255 = vld [vmem:[%s1243 + $0x58] sm:$0xff]
    %v1256 = vld [vmem:[%s1243 + $0x60] sm:$0xff]
    %v1257 = vld [vmem:[%s1243 + $0x68] sm:$0xff]
    %v1258 = vld [vmem:[%s1243 + $0x70] sm:$0xff]
    %v1259 = vld [vmem:[%s1243 + $0x78] sm:$0xff]
    %v1260 = vld [vmem:[%s1243 + $0x80] sm:$0xff]
    %v1261 = vld [vmem:[%s1243 + $0x88] sm:$0xff]
    %v1262 = vld [vmem:[%s1243 + $0x90] sm:$0xff]
    %v1263 = vld [vmem:[%s1243 + $0x98] sm:$0xff]
    %v1264 = vld [vmem:[%s1243 + $0xa0] sm:$0xff]
    %v1265 = vld [vmem:[%s1243 + $0xa8] sm:$0xff]
    %v1266 = vld [vmem:[%s1243 + $0xb0] sm:$0xff]
    %v1267 = vld [vmem:[%s1243 + $0xb8] sm:$0xff]
    %v1268 = vld [vmem:[%s1243 + $0xc0] sm:$0xff]
    %v1269 = vld [vmem:[%s1243 + $0xc8] sm:$0xff]
    %v1270 = vld [vmem:[%s1243 + $0xd0] sm:$0xff]
    %v1271 = vld [vmem:[%s1243 + $0xd8] sm:$0xff]
    %v1272 = vld [vmem:[%s1243 + $0xe0] sm:$0xff]
    %v1273 = vld [vmem:[%s1243 + $0xe8] sm:$0xff]
    %v1274 = vld [vmem:[%s1243 + $0xf0] sm:$0xff]
    %v1275 = vld [vmem:[%s1243 + $0xf8] sm:$0xff]
    %v1276 = vld [vmem:[%s1243 + $0x100] sm:$0xff]
    %v1277 = vld [vmem:[%s1243 + $0x108] sm:$0xff]
    %v1278 = vld [vmem:[%s1243 + $0x110] sm:$0xff]
    %v1279 = vld [vmem:[%s1243 + $0x118] sm:$0xff]
    %v1280 = vld [vmem:[%s1243 + $0x120] sm:$0xff]
    %v1281 = vld [vmem:[%s1243 + $0x128] sm:$0xff]
    %v1282 = vld [vmem:[%s1243 + $0x130] sm:$0xff]
    %v1283 = vld [vmem:[%s1243 + $0x138] sm:$0xff]
    %v1284 = vld [vmem:[%s1243 + $0x140] sm:$0xff]
    %v1285 = vld [vmem:[%s1243 + $0x148] sm:$0xff]
    %v1286 = vld [vmem:[%s1243 + $0x150] sm:$0xff]
    %v1287 = vld [vmem:[%s1243 + $0x158] sm:$0xff]
    %v1288 = vld [vmem:[%s1243 + $0x160] sm:$0xff]
    %v1289 = vld [vmem:[%s1243 + $0x168] sm:$0xff]
    %v1290 = vld [vmem:[%s1243 + $0x170] sm:$0xff]
    %v1291 = vld [vmem:[%s1243 + $0x178] sm:$0xff]
    %s1292 = scalar_lea.vmem %s3, 9
    %v1293 = vld [vmem:[%s1292] sm:$0x7]
    %v1295 = vperm.slane %v1293, 0
    %v1296 = vperm.slane %v1293, 1
    %v1297 = vperm.slane %v1293, 2
    %1301 = vmatpush.msra.mxu0 %v1289
    %1302 = vmatpush.msra.mxu0 %v1286
    %1303 = vmatpush.msra.mxu0 %v1283
    %1304 = vmatpush.msra.mxu0 %v1280
    %1305 = vmatpush.msra.mxu0 %v1277
    %1306 = vmatpush.msra.mxu0 %v1274
    %1307 = vmatpush.msra.mxu0 %v1271
    %1308 = vmatpush.msra.mxu0 %v1268
    %1309 = vmatpush.msra.mxu0 %v1265
    %1310 = vmatpush.msra.mxu0 %v1262
    %1311 = vmatpush.msra.mxu0 %v1259
    %1312 = vmatpush.msra.mxu0 %v1256
    %1313 = vmatpush.msra.mxu0 %v1253
    %1314 = vmatpush.msra.mxu0 %v1250
    %1315 = vmatpush.msra.mxu0 %v1247
    %1316 = vmatpush.msra.mxu0 %v1244
    %1317 = vmatmul.f32.gmra.mxu0 %v1235
    %v1318 = vpop.f32.mrf.mxu0
    %v1319 = vadd.f32 %v1295, %v1318
    %1320 = vmatmul.f32.gmra.mxu0 %v1236
    %v1321 = vpop.f32.mrf.mxu0
    %v1322 = vadd.f32 %v1295, %v1321
    %1323 = vmatmul.f32.gmra.mxu0 %v1237
    %v1324 = vpop.f32.mrf.mxu0
    %v1325 = vadd.f32 %v1295, %v1324
    %1326 = vmatmul.f32.gmra.mxu0 %v1238
    %v1327 = vpop.f32.mrf.mxu0
    %v1328 = vadd.f32 %v1295, %v1327
    %1329 = vmatmul.f32.gmra.mxu0 %v1239
    %v1330 = vpop.f32.mrf.mxu0
    %v1331 = vadd.f32 %v1295, %v1330
    %1332 = vmatmul.f32.gmra.mxu0 %v1240
    %v1333 = vpop.f32.mrf.mxu0
    %v1334 = vadd.f32 %v1295, %v1333
    %1335 = vmatmul.f32.gmra.mxu0 %v1241
    %v1336 = vpop.f32.mrf.mxu0
    %v1337 = vadd.f32 %v1295, %v1336
    %1338 = vmatmul.f32.gmra.mxu0 %v1242
    %v1339 = vpop.f32.mrf.mxu0
    %v1340 = vadd.f32 %v1295, %v1339
    %1341 = vdwg.mxu0
    %1342 = vmatpush.msra.mxu0 %v1290
    %1343 = vmatpush.msra.mxu0 %v1287
    %1344 = vmatpush.msra.mxu0 %v1284
    %1345 = vmatpush.msra.mxu0 %v1281
    %1346 = vmatpush.msra.mxu0 %v1278
    %1347 = vmatpush.msra.mxu0 %v1275
    %1348 = vmatpush.msra.mxu0 %v1272
    %1349 = vmatpush.msra.mxu0 %v1269
    %1350 = vmatpush.msra.mxu0 %v1266
    %1351 = vmatpush.msra.mxu0 %v1263
    %1352 = vmatpush.msra.mxu0 %v1260
    %1353 = vmatpush.msra.mxu0 %v1257
    %1354 = vmatpush.msra.mxu0 %v1254
    %1355 = vmatpush.msra.mxu0 %v1251
    %1356 = vmatpush.msra.mxu0 %v1248
    %1357 = vmatpush.msra.mxu0 %v1245
    %1358 = vmatmul.f32.gmra.mxu0 %v1235
    %v1359 = vpop.f32.mrf.mxu0
    %v1360 = vadd.f32 %v1296, %v1359
    %1361 = vmatmul.f32.gmra.mxu0 %v1236
    %v1362 = vpop.f32.mrf.mxu0
    %v1363 = vadd.f32 %v1296, %v1362
    %1364 = vmatmul.f32.gmra.mxu0 %v1237
    %v1365 = vpop.f32.mrf.mxu0
    %v1366 = vadd.f32 %v1296, %v1365
    %1367 = vmatmul.f32.gmra.mxu0 %v1238
    %v1368 = vpop.f32.mrf.mxu0
    %v1369 = vadd.f32 %v1296, %v1368
    %1370 = vmatmul.f32.gmra.mxu0 %v1239
    %v1371 = vpop.f32.mrf.mxu0
    %v1372 = vadd.f32 %v1296, %v1371
    %1373 = vmatmul.f32.gmra.mxu0 %v1240
    %v1374 = vpop.f32.mrf.mxu0
    %v1375 = vadd.f32 %v1296, %v1374
    %1376 = vmatmul.f32.gmra.mxu0 %v1241
    %v1377 = vpop.f32.mrf.mxu0
    %v1378 = vadd.f32 %v1296, %v1377
    %1379 = vmatmul.f32.gmra.mxu0 %v1242
    %v1380 = vpop.f32.mrf.mxu0
    %v1381 = vadd.f32 %v1296, %v1380
    %1382 = vdwg.mxu0
    %1383 = vmatpush.msra.mxu0 %v1291
    %1384 = vmatpush.msra.mxu0 %v1288
    %1385 = vmatpush.msra.mxu0 %v1285
    %1386 = vmatpush.msra.mxu0 %v1282
    %1387 = vmatpush.msra.mxu0 %v1279
    %1388 = vmatpush.msra.mxu0 %v1276
    %1389 = vmatpush.msra.mxu0 %v1273
    %1390 = vmatpush.msra.mxu0 %v1270
    %1391 = vmatpush.msra.mxu0 %v1267
    %1392 = vmatpush.msra.mxu0 %v1264
    %1393 = vmatpush.msra.mxu0 %v1261
    %1394 = vmatpush.msra.mxu0 %v1258
    %1395 = vmatpush.msra.mxu0 %v1255
    %1396 = vmatpush.msra.mxu0 %v1252
    %1397 = vmatpush.msra.mxu0 %v1249
    %1398 = vmatpush.msra.mxu0 %v1246
    %1399 = vmatmul.f32.gmra.mxu0 %v1235
    %v1400 = vpop.f32.mrf.mxu0
    %v1401 = vadd.f32 %v1297, %v1400
    %1402 = vmatmul.f32.gmra.mxu0 %v1236
    %v1403 = vpop.f32.mrf.mxu0
    %v1404 = vadd.f32 %v1297, %v1403
    %1405 = vmatmul.f32.gmra.mxu0 %v1237
    %v1406 = vpop.f32.mrf.mxu0
    %v1407 = vadd.f32 %v1297, %v1406
    %1408 = vmatmul.f32.gmra.mxu0 %v1238
    %v1409 = vpop.f32.mrf.mxu0
    %v1410 = vadd.f32 %v1297, %v1409
    %1411 = vmatmul.f32.gmra.mxu0 %v1239
    %v1412 = vpop.f32.mrf.mxu0
    %v1413 = vadd.f32 %v1297, %v1412
    %1414 = vmatmul.f32.gmra.mxu0 %v1240
    %v1415 = vpop.f32.mrf.mxu0
    %v1416 = vadd.f32 %v1297, %v1415
    %1417 = vmatmul.f32.gmra.mxu0 %v1241
    %v1418 = vpop.f32.mrf.mxu0
    %v1419 = vadd.f32 %v1297, %v1418
    %1420 = vmatmul.f32.gmra.mxu0 %v1242
    %v1421 = vpop.f32.mrf.mxu0
    %v1422 = vadd.f32 %v1297, %v1421
    %1423 = vdwg.mxu0
    %1424 = vst [vmem:[#allocation4] sm:$0xff] %v1319
    %1425 = vst [vmem:[#allocation4 + $0x8] sm:$0xff] %v1360
    %1426 = vst [vmem:[#allocation4 + $0x10] sm:$0xff] %v1401
    %1427 = vst [vmem:[#allocation4 + $0x18] sm:$0xff] %v1322
    %1428 = vst [vmem:[#allocation4 + $0x20] sm:$0xff] %v1363
    %1429 = vst [vmem:[#allocation4 + $0x28] sm:$0xff] %v1404
    %1430 = vst [vmem:[#allocation4 + $0x30] sm:$0xff] %v1325
    %1431 = vst [vmem:[#allocation4 + $0x38] sm:$0xff] %v1366
    %1432 = vst [vmem:[#allocation4 + $0x40] sm:$0xff] %v1407
    %1433 = vst [vmem:[#allocation4 + $0x48] sm:$0xff] %v1328
    %1434 = vst [vmem:[#allocation4 + $0x50] sm:$0xff] %v1369
    %1435 = vst [vmem:[#allocation4 + $0x58] sm:$0xff] %v1410
    %1436 = vst [vmem:[#allocation4 + $0x60] sm:$0xff] %v1331
    %1437 = vst [vmem:[#allocation4 + $0x68] sm:$0xff] %v1372
    %1438 = vst [vmem:[#allocation4 + $0x70] sm:$0xff] %v1413
    %1439 = vst [vmem:[#allocation4 + $0x78] sm:$0xff] %v1334
    %1440 = vst [vmem:[#allocation4 + $0x80] sm:$0xff] %v1375
    %1441 = vst [vmem:[#allocation4 + $0x88] sm:$0xff] %v1416
    %1442 = vst [vmem:[#allocation4 + $0x90] sm:$0xff] %v1337
    %1443 = vst [vmem:[#allocation4 + $0x98] sm:$0xff] %v1378
    %1444 = vst [vmem:[#allocation4 + $0xa0] sm:$0xff] %v1419
    %1445 = vst [vmem:[#allocation4 + $0xa8] sm:$0xff] %v1340
    %1446 = vst [vmem:[#allocation4 + $0xb0] sm:$0xff] %v1381
    %1447 = vst [vmem:[#allocation4 + $0xb8] sm:$0xff] %v1422
    loop: start=0, step=1, limit=8
    $region51: #{_lambda_.2} parent=1 // loop_pre_header
      _
    $region52: #{_lambda_.2} parent=1 // loop_header
      %s1449 = sphi 0, %s1453
      %p1450 = scmp.ge.s32.totalorder %s1449, 8
    $region53: #{_lambda_.2} parent=1 // loop_header_branch
      %1452 = sbr.rel (%p1450) target = $region57
    $region54: #{_lambda_.2} parent=1 // loop_body
      %v1454 = vld [vmem:[#allocation5] sm:$0xff]
      %s1455 = smul.u32 %s1449, 3
      %s1456 = smul.addr %s1455, 8
      %s1457 = scalar_lea.vmem [#allocation4], %s1456
      %v1458 = vld [vmem:[%s1457] sm:$0xff]
      %v1459 = vld [vmem:[%s1457 + $0x8] sm:$0xff]
      %v1460 = vld [vmem:[%s1457 + $0x10] sm:$0xff]
      %s1461 = scalar_lea.vmem [#allocation8], 1152
      %v1462 = vld [vmem:[%s1461] sm:$0xff]
      %v1463 = vld [vmem:[%s1461 + $0x8] sm:$0xff]
      %v1464 = vld [vmem:[%s1461 + $0x10] sm:$0xff]
      %v1465 = vld [vmem:[%s1461 + $0x18] sm:$0xff]
      %v1466 = vld [vmem:[%s1461 + $0x20] sm:$0xff]
      %v1467 = vld [vmem:[%s1461 + $0x28] sm:$0xff]
      %v1468 = vld [vmem:[%s1461 + $0x30] sm:$0xff]
      %v1469 = vld [vmem:[%s1461 + $0x38] sm:$0xff]
      %v1470 = vld [vmem:[%s1461 + $0x40] sm:$0xff]
      %v1471 = vld [vmem:[%s1461 + $0x48] sm:$0xff]
      %v1472 = vld [vmem:[%s1461 + $0x50] sm:$0xff]
      %v1473 = vld [vmem:[%s1461 + $0x58] sm:$0xff]
      %v1474 = vld [vmem:[%s1461 + $0x60] sm:$0xff]
      %v1475 = vld [vmem:[%s1461 + $0x68] sm:$0xff]
      %v1476 = vld [vmem:[%s1461 + $0x70] sm:$0xff]
      %v1477 = vld [vmem:[%s1461 + $0x78] sm:$0xff]
      %v1478 = vld [vmem:[%s1461 + $0x80] sm:$0xff]
      %v1479 = vld [vmem:[%s1461 + $0x88] sm:$0xff]
      %v1480 = vld [vmem:[%s1461 + $0x90] sm:$0xff]
      %v1481 = vld [vmem:[%s1461 + $0x98] sm:$0xff]
      %v1482 = vld [vmem:[%s1461 + $0xa0] sm:$0xff]
      %v1483 = vld [vmem:[%s1461 + $0xa8] sm:$0xff]
      %v1484 = vld [vmem:[%s1461 + $0xb0] sm:$0xff]
      %v1485 = vld [vmem:[%s1461 + $0xb8] sm:$0xff]
      %v1486 = vld [vmem:[%s1461 + $0xc0] sm:$0xff]
      %v1487 = vld [vmem:[%s1461 + $0xc8] sm:$0xff]
      %v1488 = vld [vmem:[%s1461 + $0xd0] sm:$0xff]
      %v1489 = vld [vmem:[%s1461 + $0xd8] sm:$0xff]
      %v1490 = vld [vmem:[%s1461 + $0xe0] sm:$0xff]
      %v1491 = vld [vmem:[%s1461 + $0xe8] sm:$0xff]
      %v1492 = vld [vmem:[%s1461 + $0xf0] sm:$0xff]
      %v1493 = vld [vmem:[%s1461 + $0xf8] sm:$0xff]
      %v1494 = vld [vmem:[%s1461 + $0x100] sm:$0xff]
      %v1495 = vld [vmem:[%s1461 + $0x108] sm:$0xff]
      %v1496 = vld [vmem:[%s1461 + $0x110] sm:$0xff]
      %v1497 = vld [vmem:[%s1461 + $0x118] sm:$0xff]
      %v1498 = vld [vmem:[%s1461 + $0x120] sm:$0xff]
      %v1499 = vld [vmem:[%s1461 + $0x128] sm:$0xff]
      %v1500 = vld [vmem:[%s1461 + $0x130] sm:$0xff]
      %v1501 = vld [vmem:[%s1461 + $0x138] sm:$0xff]
      %v1502 = vld [vmem:[%s1461 + $0x140] sm:$0xff]
      %v1503 = vld [vmem:[%s1461 + $0x148] sm:$0xff]
      %v1504 = vld [vmem:[%s1461 + $0x150] sm:$0xff]
      %v1505 = vld [vmem:[%s1461 + $0x158] sm:$0xff]
      %v1506 = vld [vmem:[%s1461 + $0x160] sm:$0xff]
      %v1507 = vld [vmem:[%s1461 + $0x168] sm:$0xff]
      %v1508 = vld [vmem:[%s1461 + $0x170] sm:$0xff]
      %v1509 = vld [vmem:[%s1461 + $0x178] sm:$0xff]
      %1510 = vmatpush.msra.mxu0 %v1507
      %1511 = vmatpush.msra.mxu0 %v1504
      %1512 = vmatpush.msra.mxu0 %v1501
      %1513 = vmatpush.msra.mxu0 %v1498
      %1514 = vmatpush.msra.mxu0 %v1495
      %1515 = vmatpush.msra.mxu0 %v1492
      %1516 = vmatpush.msra.mxu0 %v1489
      %1517 = vmatpush.msra.mxu0 %v1486
      %1518 = vmatpush.msra.mxu0 %v1483
      %1519 = vmatpush.msra.mxu0 %v1480
      %1520 = vmatpush.msra.mxu0 %v1477
      %1521 = vmatpush.msra.mxu0 %v1474
      %1522 = vmatpush.msra.mxu0 %v1471
      %1523 = vmatpush.msra.mxu0 %v1468
      %1524 = vmatpush.msra.mxu0 %v1465
      %1525 = vmatpush.msra.mxu0 %v1462
      %1526 = vmatmul.f32.gmra.mxu0 %v1454
      %v1527 = vpop.f32.mrf.mxu0
      %v1528 = vadd.f32 0.0, %v1527
      %1529 = vdwg.mxu0
      %1530 = vmatpush.msra.mxu0 %v1508
      %1531 = vmatpush.msra.mxu0 %v1505
      %1532 = vmatpush.msra.mxu0 %v1502
      %1533 = vmatpush.msra.mxu0 %v1499
      %1534 = vmatpush.msra.mxu0 %v1496
      %1535 = vmatpush.msra.mxu0 %v1493
      %1536 = vmatpush.msra.mxu0 %v1490
      %1537 = vmatpush.msra.mxu0 %v1487
      %1538 = vmatpush.msra.mxu0 %v1484
      %1539 = vmatpush.msra.mxu0 %v1481
      %1540 = vmatpush.msra.mxu0 %v1478
      %1541 = vmatpush.msra.mxu0 %v1475
      %1542 = vmatpush.msra.mxu0 %v1472
      %1543 = vmatpush.msra.mxu0 %v1469
      %1544 = vmatpush.msra.mxu0 %v1466
      %1545 = vmatpush.msra.mxu0 %v1463
      %1546 = vmatmul.f32.gmra.mxu0 %v1454
      %v1547 = vpop.f32.mrf.mxu0
      %v1548 = vadd.f32 0.0, %v1547
      %1549 = vdwg.mxu0
      %1550 = vmatpush.msra.mxu0 %v1509
      %1551 = vmatpush.msra.mxu0 %v1506
      %1552 = vmatpush.msra.mxu0 %v1503
      %1553 = vmatpush.msra.mxu0 %v1500
      %1554 = vmatpush.msra.mxu0 %v1497
      %1555 = vmatpush.msra.mxu0 %v1494
      %1556 = vmatpush.msra.mxu0 %v1491
      %1557 = vmatpush.msra.mxu0 %v1488
      %1558 = vmatpush.msra.mxu0 %v1485
      %1559 = vmatpush.msra.mxu0 %v1482
      %1560 = vmatpush.msra.mxu0 %v1479
      %1561 = vmatpush.msra.mxu0 %v1476
      %1562 = vmatpush.msra.mxu0 %v1473
      %1563 = vmatpush.msra.mxu0 %v1470
      %1564 = vmatpush.msra.mxu0 %v1467
      %1565 = vmatpush.msra.mxu0 %v1464
      %1566 = vmatmul.f32.gmra.mxu0 %v1454
      %v1567 = vpop.f32.mrf.mxu0
      %v1568 = vadd.f32 0.0, %v1567
      %1569 = vdwg.mxu0
      %v1570 = vadd.f32 %v1458, %v1528
      %v1571 = vxor.u32 %v1570, 2147483648
      %v1572 = vmul.f32 %v1571, 1.442695
      %v1573 = vpow.pop %v1572
      %v1574 = vadd.f32 %v1573, 1.0
      %v1575 = vrcp.pop %v1574
      %v1576 = vmul.f32 %v1574, %v1575
      %v1577 = vsub.f32 1.0, %v1576
      %v1578 = vmul.f32 %v1575, %v1577
      %v1579 = vadd.f32 %v1575, %v1578
      %vm1580 = vweird.f32 %v1574
      %vm1581 = vweird.f32 %v1575
      %vm1582 = vmor %vm1580, %vm1581
      %v1583 = vsel %vm1582, %v1575, %v1579
      %v1584 = vand.u32 2147483647, %v1574
      %vm1585 = vcmp.eq.f32.partialorder %v1584, 8.507059e+37
      %v1586 = vand.u32 %v1574, 2147483648
      %v1587 = vor.u32 1.1754944e-38, %v1586
      %v1588 = vsel %vm1585, %v1587, %v1583
      %v1589 = vmul.f32 1.0, %v1588
      %v1590 = vadd.f32 %v1459, %v1548
      %v1591 = vxor.u32 %v1590, 2147483648
      %v1592 = vmul.f32 %v1591, 1.442695
      %v1593 = vpow.pop %v1592
      %v1594 = vadd.f32 %v1593, 1.0
      %v1595 = vrcp.pop %v1594
      %v1596 = vmul.f32 %v1594, %v1595
      %v1597 = vsub.f32 1.0, %v1596
      %v1598 = vmul.f32 %v1595, %v1597
      %v1599 = vadd.f32 %v1595, %v1598
      %vm1600 = vweird.f32 %v1594
      %vm1601 = vweird.f32 %v1595
      %vm1602 = vmor %vm1600, %vm1601
      %v1603 = vsel %vm1602, %v1595, %v1599
      %v1604 = vand.u32 2147483647, %v1594
      %vm1605 = vcmp.eq.f32.partialorder %v1604, 8.507059e+37
      %v1606 = vand.u32 %v1594, 2147483648
      %v1607 = vor.u32 1.1754944e-38, %v1606
      %v1608 = vsel %vm1605, %v1607, %v1603
      %v1609 = vmul.f32 1.0, %v1608
      %s1610 = scalar_lea.vmem %s4, 3
      %v1611 = vld [vmem:[%s1610] sm:$0x1]
      %v1613 = vperm.slane %v1611, 0
      %v1615 = vadd.f32 %v1568, %v1613
      %v1616 = vmul.f32 %v1589, %v1615
      %v1617 = vadd.f32 %v1460, %v1616
      %v1618 = vtanh.pop %v1617
      %v1619 = vsub.f32 1.0, %v1609
      %v1620 = vmul.f32 %v1619, %v1618
      %v1621 = vmul.f32 %v1609, %v1454
      %v1622 = vadd.f32 %v1620, %v1621
      %1623 = vst [vmem:[#allocation5] sm:$0xff] %v1622
      %s1624 = sadd.s32 0, %s1449
      %s1625 = smul.u32 %s1624, 8
      %s1626 = scalar_lea.vmem %s5, %s1625
      %1627 = vst [vmem:[%s1626] sm:$0xff] %v1622
    $region55: #{_lambda_.2} parent=1 // loop_footer
      %s1453 = sadd.s32 1, %s1449
    $region56: #{_lambda_.2} parent=1 // loop_footer_branch
      %1448 = sbr.rel target = $region52
    $region57: #{_lambda_.2} parent=1 // loop_exit
      _
    // Predicated region
    $region58: #{_lambda_.2} parent=1 // pred_check
      _
    $region59: #{_lambda_.2} parent=1 // pred_check_branch
      %1629 = sbr.rel (0) target = $region61
    $region60: #{_lambda_.2} parent=1 // pred_region
      _
    $region61: #{_lambda_.2} parent=1 // pred_fallthru
      _
    // Predicated region
    $region62: #{_lambda_.2} parent=1 // pred_check
      _
    $region63: #{_lambda_.2} parent=1 // pred_check_branch
      %1631 = sbr.rel (0) target = $region65
    $region64: #{_lambda_.2} parent=1 // pred_region
      _
    $region65: #{_lambda_.2} parent=1 // pred_fallthru
      _
    %1632 = vsyncpa [#allocation7], 1
    %1633 = vsyncpa [#allocation9], 1

</llo_original>
